<compile_context>
chip_gen: v5e
topology: v5e:2x2
jax: 0.10.0
libtpu: 0.0.40
codegen_flags: <defaults>
</compile_context>

<pallas_src>
import functools
import math

import jax
import jax.numpy as jnp
import numpy as np
from jax import lax
from jax.experimental import pallas as pl
from jax.experimental.pallas import tpu as pltpu

_NEG_INF = -1000000000.0   # matches masked_fill(mask == 0, -1e9) in the module


# ----------------------------------------------------------------------------
# Fused MHA kernel: projections + attention + output projection for one
# (batch, q-block) grid step.
# ----------------------------------------------------------------------------
def _mha_fused_kernel(*refs, head, d_k, mask_mode, shared_qkv, need_weights):
    """Ref order (inputs, then outputs):
      activations : x (1,S,E) if shared_qkv else q (1,bq,E), k (1,S,E), v (1,S,E)  [bf16]
      w_qkv       : (3, E, E) bf16  stacked W_q|W_k|W_v, (in,out) layout,
                                    1/sqrt(d_k) pre-folded into W_q
      b_qkv       : (3, 1, E) f32   stacked biases (scale folded into b_q)
      w_o         : (E, E)    bf16  output projection, (in,out) layout
      b_o         : (1, E)    f32
      [mask_bias] : (bq, S)   f32   additive bias, only if mask_mode == "bias"
      o           : (1, bq, E)
      [p_attn]    : (1, H, bq, S)   only if need_weights
    """
    it = iter(refs)
    if shared_qkv:
        xq_ref = xk_ref = xv_ref = next(it)
    else:
        xq_ref, xk_ref, xv_ref = next(it), next(it), next(it)
    w_ref, b_ref, wo_ref, bo_ref = next(it), next(it), next(it), next(it)
    mb_ref = next(it) if mask_mode == "bias" else None
    o_ref = next(it)
    p_ref = next(it) if need_weights else None

    bq = xq_ref.shape[1]        # q rows handled by this grid step
    skv = xk_ref.shape[1]       # full kv length
    e_out = wo_ref.shape[1]

    xq = xq_ref[0]              # (bq, E)  bf16
    xk = xk_ref[0]              # (skv, E) bf16
    xv = xv_ref[0]

    # Fused Q/K/V projections: bf16 MXU inputs, f32 accumulation.  The
    # 1/sqrt(d_k) scale was folded into W_q / b_q at init.
    qp = jnp.dot(xq, w_ref[0], preferred_element_type=jnp.float32) + b_ref[0]
    kp = jnp.dot(xk, w_ref[1], preferred_element_type=jnp.float32) + b_ref[1]
    vp = jnp.dot(xv, w_ref[2], preferred_element_type=jnp.float32) + b_ref[2]

    # Additive mask bias for this q block (f32, shared across heads).
    if mask_mode == "causal":
        # Generated in-kernel (two iotas + compare + select on the VPU) instead
        # of streaming an (S, S) f32 array through HBM/VMEM.
        q0 = pl.program_id(1) * bq
        row = q0 + lax.broadcasted_iota(jnp.int32, (bq, skv), 0)
        col = lax.broadcasted_iota(jnp.int32, (bq, skv), 1)
        mb = jnp.where(col > row, jnp.float32(_NEG_INF), jnp.float32(0.0))
    elif mask_mode == "bias":
        mb = mb_ref[...]
    else:
        mb = None

    # Per-head attention.  The output projection is accumulated per head
    # against the matching (sublane-aligned) row slice of W_o, so there is no
    # (S, E) ctx scratch round-trip and no masked lane-sliced stores.
    # TODO(synk): at H >= 8 / long S this static unroll should become a
    # flash-style (q-block, kv-block) grid with online-softmax accumulators.
    acc = jnp.zeros((bq, e_out), jnp.float32)
    for h in range(head):
        lo = h * d_k
        qh = qp[:, lo:lo + d_k].astype(jnp.bfloat16)
        kh = kp[:, lo:lo + d_k].astype(jnp.bfloat16)
        vh = vp[:, lo:lo + d_k].astype(jnp.bfloat16)
        # scores = qh @ kh^T without materialising a transpose of K.
        s = lax.dot_general(qh, kh, (((1,), (1,)), ((), ())),
                            preferred_element_type=jnp.float32)
        if mb is not None:
            s = s + mb
        # Softmax kept in f32; normalisation uses the EUP reciprocal slot.
        s = s - jnp.max(s, axis=-1, keepdims=True)
        ex = jnp.exp(s)
        p = ex * pl.reciprocal(jnp.sum(ex, axis=-1, keepdims=True), approx=True)
        # TODO(synk): Dropout(p=0.1) on p_attn omitted (eval-mode identity).
        if p_ref is not None:
            p_ref[0, h] = p
        ctx = jnp.dot(p.astype(jnp.bfloat16), vh,
                      preferred_element_type=jnp.float32)
        acc = acc + jnp.dot(ctx.astype(jnp.bfloat16), wo_ref[lo:lo + d_k, :],
                            preferred_element_type=jnp.float32)

    # Single lane-dense store of the finished (bq, E) output tile.
    o_ref[0] = (acc + bo_ref[...]).astype(o_ref.dtype)


def mha_forward_pallas(query, key, value, w_qkv, b_qkv, w_o, b_o, *, head,
                       mask_bias=None, mask_mode="none", need_weights=False,
                       block_q=None, shared_qkv=False):
    """query: (B, Sq, E); key/value: (B, Skv, E).  Returns (out, p_attn|None)."""
    B, Sq, E = query.shape
    Skv = key.shape[1]
    d_k = E // head

    if shared_qkv:
        block_q = Sq                        # one tile feeds Q, K and V
    if block_q is None:
        block_q = Sq if Sq <= 128 else 128  # (8,128)-friendly q tiling
    nq = pl.cdiv(Sq, block_q)

    kernel = functools.partial(_mha_fused_kernel, head=head, d_k=d_k,
                               mask_mode=mask_mode, shared_qkv=shared_qkv,
                               need_weights=need_weights)

    # bf16 MXU inputs: activations cast once here (halves HBM->VMEM traffic);
    # weights were pre-cast at init; biases / softmax / accumulators stay f32.
    qb = query.astype(jnp.bfloat16)
    operands = []
    if shared_qkv:
        operands.append(qb)
    else:
        operands += [qb, key.astype(jnp.bfloat16), value.astype(jnp.bfloat16)]
    operands += [w_qkv, b_qkv, w_o, b_o]
    if mask_mode == "bias":
        operands.append(mask_bias)

    out_shape = [jax.ShapeDtypeStruct((B, Sq, E), query.dtype)]
    out_specs = [pl.BlockSpec((1, block_q, E), lambda b, qi: (b, qi, 0))]
    if need_weights:
        out_shape.append(jax.ShapeDtypeStruct((B, head, Sq, Skv), jnp.float32))
        out_specs.append(pl.BlockSpec((1, head, block_q, Skv),
                                      lambda b, qi: (b, 0, qi, 0)))

    # Advisory cost estimate for XLA's scheduler.
    flops = B * nq * (2 * block_q * E * E          # Q projection
                      + 4 * Skv * E * E            # K and V projections
                      + 4 * block_q * Skv * E      # QK^T and PV over all heads
                      + 2 * block_q * E * E)       # output projection
    transcendentals = B * nq * head * (block_q * Skv + block_q)
    bytes_accessed = (2 * B * Sq * E
                      + (0 if shared_qkv else 4 * B * nq * Skv * E)
                      + B * nq * (4 * E * E * 2 + 4 * E * 4)
                      + 4 * B * Sq * E)
    if mask_mode == "bias":
        bytes_accessed += 4 * B * nq * block_q * Skv
    if need_weights:
        bytes_accessed += 4 * B * head * Sq * Skv

    # Explicit VMEM budget (matters on v7x: 64 MiB physical / 32 MiB default).
    w_bytes = 4 * E * E * 2 + 4 * E * 4
    act_bytes = block_q * E * 2 + (0 if shared_qkv else 2 * Skv * E * 2)
    mask_bytes = block_q * Skv * 4 if mask_mode == "bias" else 0
    out_bytes = block_q * E * 4 + (head * block_q * Skv * 4 if need_weights else 0)
    vmem_limit = int(min(64 * 1024 * 1024,
                         max(16 * 1024 * 1024,
                             4 * (w_bytes + act_bytes + mask_bytes + out_bytes))))

    def make_call(single_buffer_consts):
        def const_spec(shape):
            imap = lambda b, qi: (0,) * len(shape)
            if single_buffer_consts:
                # Grid-invariant operands: one VMEM buffer is enough (halves
                # the weight footprint vs default double-buffering).
                return pl.BlockSpec(shape, imap, pipeline_mode=pl.Buffered(1))
            return pl.BlockSpec(shape, imap)

        in_specs = []
        if shared_qkv:
            in_specs.append(pl.BlockSpec((1, Sq, E), lambda b, qi: (b, 0, 0)))
        else:
            in_specs.append(pl.BlockSpec((1, block_q, E), lambda b, qi: (b, qi, 0)))
            in_specs.append(pl.BlockSpec((1, Skv, E), lambda b, qi: (b, 0, 0)))
            in_specs.append(pl.BlockSpec((1, Skv, E), lambda b, qi: (b, 0, 0)))
        in_specs += [const_spec((3, E, E)), const_spec((3, 1, E)),
                     const_spec((E, E)), const_spec((1, E))]
        if mask_mode == "bias":
            in_specs.append(pl.BlockSpec((block_q, Skv), lambda b, qi: (qi, 0)))

        return pl.pallas_call(
            kernel,
            out_shape=tuple(out_shape),
            grid=(B, nq),
            in_specs=in_specs,
            out_specs=tuple(out_specs),
            compiler_params=pltpu.CompilerParams(
                dimension_semantics=("parallel", "parallel"),
                vmem_limit_bytes=vmem_limit),
            cost_estimate=pl.CostEstimate(flops=flops,
                                          transcendentals=transcendentals,
                                          bytes_accessed=bytes_accessed),
        )

    try:
        result = make_call(True)(*operands)
    except Exception:
        # pl.Buffered(1) not accepted by this jax build -> default buffering.
        result = make_call(False)(*operands)

    if need_weights:
        out, p = result
        return out, p
    (out,) = result
    return out, None


def _is_causal_mask(m2d):
    """Best-effort check that a *concrete* mask equals subsequentMask(S)."""
    try:
        arr = np.asarray(m2d)
    except Exception:           # traced value -> use the general bias path
        return False
    s0, s1 = arr.shape
    if s0 != s1:
        return False
    return bool(np.array_equal(arr != 0, np.tril(np.ones((s0, s1), dtype=bool))))


# ----------------------------------------------------------------------------
# Module wrapper: parameters mirror torch.nn.Linear defaults; kernel layouts
# (transpose + stack + scale fold + bf16 cast) are prepared once at init.
# ----------------------------------------------------------------------------
class MultiHeadAttentionPallas:
    def __init__(self, head, embedding_dim, key, dropout=0.1):
        assert embedding_dim % head == 0
        self.head = head
        self.d_k = embedding_dim // head
        self.embedding_dim = embedding_dim
        self.attn = None
        # TODO(synk): dropout(p=0.1) on p_attn omitted -> eval-mode (identity).

        # torch.nn.Linear default init: U(-1/sqrt(fan_in), 1/sqrt(fan_in)).
        bound = 1.0 / math.sqrt(embedding_dim)
        ks = jax.random.split(key, 8)
        self.weights = [
            jax.random.uniform(ks[2 * i], (embedding_dim, embedding_dim),
                               jnp.float32, -bound, bound)
            for i in range(4)
        ]
        self.biases = [
            jax.random.uniform(ks[2 * i + 1], (embedding_dim,),
                               jnp.float32, -bound, bound)
            for i in range(4)
        ]

        # Kernel-side parameter layout (prepared ONCE):
        #   (in, out) layout, 1/sqrt(d_k) folded into W_q/b_q, weights in bf16.
        scale = 1.0 / math.sqrt(self.d_k)
        wq, wk, wv, wo = self.weights
        bq_, bk_, bv_, bo_ = self.biases
        self.w_qkv = jnp.stack([wq.T * scale, wk.T, wv.T]).astype(jnp.bfloat16)
        self.b_qkv = jnp.stack([bq_ * scale, bk_, bv_])[:, None, :]   # (3,1,E) f32
        self.w_o = wo.T.astype(jnp.bfloat16)                          # (E,E)  bf16
        self.b_o = bo_[None, :]                                       # (1,E)  f32

    def __call__(self, query, key, value, mask=None, need_weights=False,
                 is_causal=None):
        # Module semantics: mask.unsqueeze(0) broadcasts one (S, S) mask over
        # batch and heads, so only a batch-invariant 2-D mask is supported.
        if mask is None:
            mask_mode, mask_bias = "none", None
        else:
            m = jnp.asarray(mask)
            m2d = m.reshape(m.shape[-2], m.shape[-1])
            causal = _is_causal_mask(m2d) if is_causal is None else bool(is_causal)
            if causal:
                mask_mode, mask_bias = "causal", None     # generated in-kernel
            else:
                mask_mode = "bias"
                mask_bias = jnp.where(m2d == 0, jnp.float32(_NEG_INF),
                                      jnp.float32(0.0))

        shared = (query is key) and (key is value)
        out, p = mha_forward_pallas(
            query, key, value, self.w_qkv, self.b_qkv, self.w_o, self.b_o,
            head=self.head, mask_bias=mask_bias, mask_mode=mask_mode,
            need_weights=need_weights, shared_qkv=shared)
        self.attn = p
        return out


# Pure-JAX reference (mirrors the PyTorch forward exactly, in f32).
def reference_forward(mha, q, k, v, mask):
    B, S, E = q.shape
    H, dk = mha.head, mha.d_k
    lin = lambda x, w, b: x @ w.T + b
    qh = lin(q, mha.weights[0], mha.biases[0]).reshape(B, S, H, dk).transpose(0, 2, 1, 3)
    kh = lin(k, mha.weights[1], mha.biases[1]).reshape(B, k.shape[1], H, dk).transpose(0, 2, 1, 3)
    vh = lin(v, mha.weights[2], mha.biases[2]).reshape(B, v.shape[1], H, dk).transpose(0, 2, 1, 3)
    s = jnp.einsum("bhqd,bhkd->bhqk", qh, kh) / math.sqrt(dk)
    s = jnp.where(mask[None] == 0, _NEG_INF, s)
    p = jax.nn.softmax(s, axis=-1)
    x = jnp.einsum("bhqk,bhkd->bhqd", p, vh).transpose(0, 2, 1, 3).reshape(B, S, E)
    return lin(x, mha.weights[3], mha.biases[3])


if __name__ == "__main__":
    head, embedding_dim, B, S = 4, 32, 2, 8
    root = jax.random.PRNGKey(0)
    kparam, kq, kk, kv = jax.random.split(root, 4)

    mha = MultiHeadAttentionPallas(head, embedding_dim, kparam)

    q = jax.random.normal(kq, (B, S, embedding_dim), jnp.float32)
    k = jax.random.normal(kk, (B, S, embedding_dim), jnp.float32)
    v = jax.random.normal(kv, (B, S, embedding_dim), jnp.float32)

    # Causal mask, same as module.subsequentMask(S): (1, S, S), 1 = keep.
    mask = jnp.asarray(1 - np.triu(np.ones((1, S, S), dtype=np.uint8), k=1))

    # Tolerances reflect bf16 MXU inputs + the EUP approximate reciprocal.
    rtol = atol = 5e-2

    # 1) causal mask detected -> in-kernel iota mask path.
    out = mha(q, k, v, mask)
    jax.block_until_ready(out)
    ref = reference_forward(mha, q, k, v, mask)
    np.testing.assert_allclose(np.asarray(out), np.asarray(ref), rtol=rtol, atol=atol)

    # 2) generic additive-bias mask path (forced).
    out2 = mha(q, k, v, mask, is_causal=False)
    jax.block_until_ready(out2)
    np.testing.assert_allclose(np.asarray(out2), np.asarray(ref), rtol=rtol, atol=atol)

    # 3) self-attention dedup path (query is key is value -> one activation ref).
    out3 = mha(q, q, q, mask)
    jax.block_until_ready(out3)
    ref3 = reference_forward(mha, q, q, q, mask)
    np.testing.assert_allclose(np.asarray(out3), np.asarray(ref3), rtol=rtol, atol=atol)

    print("KERNEL_OK")
</pallas_src>

<mosaic_0001>
module attributes {stable_mosaic.version = 11 : i64} {
  func.func @_mha_fused_kernel(%arg0: i32, %arg1: i32, %arg2: memref<1x8x32xbf16, #tpu.memory_space<vmem>>, %arg3: memref<1x8x32xbf16, #tpu.memory_space<vmem>>, %arg4: memref<1x8x32xbf16, #tpu.memory_space<vmem>>, %arg5: memref<3x32x32xbf16, #tpu.memory_space<vmem>>, %arg6: memref<3x1x32xf32, #tpu.memory_space<vmem>>, %arg7: memref<32x32xbf16, #tpu.memory_space<vmem>>, %arg8: memref<1x32xf32, #tpu.memory_space<vmem>>, %arg9: memref<1x8x32xf32, #tpu.memory_space<vmem>>) attributes {dimension_semantics = [#tpu.dimension_semantics<parallel>, #tpu.dimension_semantics<parallel>], iteration_bounds = array<i64: 2, 1>, scalar_prefetch = 0 : i64, scratch_operands = 0 : i64, tpu.core_type = #tpu.core_type<tc>, window_params = [{transform_indices = @transform_0, window_bounds = array<i64: 1, 8, 32>}, {transform_indices = @transform_1, window_bounds = array<i64: 1, 8, 32>}, {transform_indices = @transform_2, window_bounds = array<i64: 1, 8, 32>}, {pipeline_mode = #tpu.pipeline_mode<synchronous>, transform_indices = @transform_3, window_bounds = array<i64: 3, 32, 32>}, {pipeline_mode = #tpu.pipeline_mode<synchronous>, transform_indices = @transform_4, window_bounds = array<i64: 3, 1, 32>}, {pipeline_mode = #tpu.pipeline_mode<synchronous>, transform_indices = @transform_5, window_bounds = array<i64: 32, 32>}, {pipeline_mode = #tpu.pipeline_mode<synchronous>, transform_indices = @transform_6, window_bounds = array<i64: 1, 32>}, {transform_indices = @transform_7, window_bounds = array<i64: 1, 8, 32>}]} {
    %c0 = arith.constant 0 : index
    %c0_0 = arith.constant 0 : index
    %c0_1 = arith.constant 0 : index
    %0 = vector.load %arg2[%c0, %c0_0, %c0_1] : memref<1x8x32xbf16, #tpu.memory_space<vmem>>, vector<1x8x32xbf16>
    %1 = vector.shape_cast %0 : vector<1x8x32xbf16> to vector<8x32xbf16>
    %c0_2 = arith.constant 0 : index
    %c0_3 = arith.constant 0 : index
    %c0_4 = arith.constant 0 : index
    %2 = vector.load %arg3[%c0_2, %c0_3, %c0_4] : memref<1x8x32xbf16, #tpu.memory_space<vmem>>, vector<1x8x32xbf16>
    %3 = vector.shape_cast %2 : vector<1x8x32xbf16> to vector<8x32xbf16>
    %c0_5 = arith.constant 0 : index
    %c0_6 = arith.constant 0 : index
    %c0_7 = arith.constant 0 : index
    %4 = vector.load %arg4[%c0_5, %c0_6, %c0_7] : memref<1x8x32xbf16, #tpu.memory_space<vmem>>, vector<1x8x32xbf16>
    %5 = vector.shape_cast %4 : vector<1x8x32xbf16> to vector<8x32xbf16>
    %c0_8 = arith.constant 0 : index
    %c0_9 = arith.constant 0 : index
    %c0_10 = arith.constant 0 : index
    %6 = vector.load %arg5[%c0_8, %c0_9, %c0_10] : memref<3x32x32xbf16, #tpu.memory_space<vmem>>, vector<1x32x32xbf16>
    %7 = vector.shape_cast %6 : vector<1x32x32xbf16> to vector<32x32xbf16>
    %cst = arith.constant dense<0.000000e+00> : vector<8x32xf32>
    %8 = tpu.matmul %1, %7, %cst {dimension_numbers = #tpu.dot_dimension_numbers<[1], [0], [0], [1], [0, 0, 1, 1], [], []>} : vector<8x32xbf16>, vector<32x32xbf16>, vector<8x32xf32> -> vector<8x32xf32>
    %c0_11 = arith.constant 0 : index
    %c0_12 = arith.constant 0 : index
    %c0_13 = arith.constant 0 : index
    %9 = vector.load %arg6[%c0_11, %c0_12, %c0_13] : memref<3x1x32xf32, #tpu.memory_space<vmem>>, vector<1x1x32xf32>
    %10 = vector.shape_cast %9 : vector<1x1x32xf32> to vector<1x32xf32>
    %11 = vector.broadcast %10 : vector<1x32xf32> to vector<8x32xf32>
    %12 = arith.addf %8, %11 : vector<8x32xf32>
    %c1 = arith.constant 1 : index
    %c0_14 = arith.constant 0 : index
    %c0_15 = arith.constant 0 : index
    %13 = vector.load %arg5[%c1, %c0_14, %c0_15] : memref<3x32x32xbf16, #tpu.memory_space<vmem>>, vector<1x32x32xbf16>
    %14 = vector.shape_cast %13 : vector<1x32x32xbf16> to vector<32x32xbf16>
    %cst_16 = arith.constant dense<0.000000e+00> : vector<8x32xf32>
    %15 = tpu.matmul %3, %14, %cst_16 {dimension_numbers = #tpu.dot_dimension_numbers<[1], [0], [0], [1], [0, 0, 1, 1], [], []>} : vector<8x32xbf16>, vector<32x32xbf16>, vector<8x32xf32> -> vector<8x32xf32>
    %c1_17 = arith.constant 1 : index
    %c0_18 = arith.constant 0 : index
    %c0_19 = arith.constant 0 : index
    %16 = vector.load %arg6[%c1_17, %c0_18, %c0_19] : memref<3x1x32xf32, #tpu.memory_space<vmem>>, vector<1x1x32xf32>
    %17 = vector.shape_cast %16 : vector<1x1x32xf32> to vector<1x32xf32>
    %18 = vector.broadcast %17 : vector<1x32xf32> to vector<8x32xf32>
    %19 = arith.addf %15, %18 : vector<8x32xf32>
    %c2 = arith.constant 2 : index
    %c0_20 = arith.constant 0 : index
    %c0_21 = arith.constant 0 : index
    %20 = vector.load %arg5[%c2, %c0_20, %c0_21] : memref<3x32x32xbf16, #tpu.memory_space<vmem>>, vector<1x32x32xbf16>
    %21 = vector.shape_cast %20 : vector<1x32x32xbf16> to vector<32x32xbf16>
    %cst_22 = arith.constant dense<0.000000e+00> : vector<8x32xf32>
    %22 = tpu.matmul %5, %21, %cst_22 {dimension_numbers = #tpu.dot_dimension_numbers<[1], [0], [0], [1], [0, 0, 1, 1], [], []>} : vector<8x32xbf16>, vector<32x32xbf16>, vector<8x32xf32> -> vector<8x32xf32>
    %c2_23 = arith.constant 2 : index
    %c0_24 = arith.constant 0 : index
    %c0_25 = arith.constant 0 : index
    %23 = vector.load %arg6[%c2_23, %c0_24, %c0_25] : memref<3x1x32xf32, #tpu.memory_space<vmem>>, vector<1x1x32xf32>
    %24 = vector.shape_cast %23 : vector<1x1x32xf32> to vector<1x32xf32>
    %25 = vector.broadcast %24 : vector<1x32xf32> to vector<8x32xf32>
    %26 = arith.addf %22, %25 : vector<8x32xf32>
    %c8_i32 = arith.constant 8 : i32
    %27 = arith.muli %arg1, %c8_i32 : i32
    %28 = tpu.iota {dimensions = array<i32: 0>} : vector<8x8xi32>
    %29 = vector.broadcast %27 : i32 to vector<8x8xi32>
    %30 = arith.addi %29, %28 : vector<8x8xi32>
    %31 = tpu.iota {dimensions = array<i32: 1>} : vector<8x8xi32>
    %32 = arith.cmpi sgt, %31, %30 : vector<8x8xi32>
    %cst_26 = arith.constant -1.000000e+09 : f32
    %cst_27 = arith.constant 0.000000e+00 : f32
    %33 = vector.broadcast %cst_26 : f32 to vector<8x8xf32>
    %34 = vector.broadcast %cst_27 : f32 to vector<8x8xf32>
    %35 = arith.select %32, %33, %34 : vector<8x8xi1>, vector<8x8xf32>
    %cst_28 = arith.constant 0.000000e+00 : f32
    %36 = vector.broadcast %cst_28 : f32 to vector<8x32xf32>
    %37 = vector.extract_strided_slice %12 {offsets = [0, 0], sizes = [8, 8], strides = [1, 1]} : vector<8x32xf32> to vector<8x8xf32>
    %38 = arith.truncf %37 : vector<8x8xf32> to vector<8x8xbf16>
    %39 = vector.extract_strided_slice %19 {offsets = [0, 0], sizes = [8, 8], strides = [1, 1]} : vector<8x32xf32> to vector<8x8xf32>
    %40 = arith.truncf %39 : vector<8x8xf32> to vector<8x8xbf16>
    %41 = vector.extract_strided_slice %26 {offsets = [0, 0], sizes = [8, 8], strides = [1, 1]} : vector<8x32xf32> to vector<8x8xf32>
    %42 = arith.truncf %41 : vector<8x8xf32> to vector<8x8xbf16>
    %cst_29 = arith.constant dense<0.000000e+00> : vector<8x8xf32>
    %43 = tpu.matmul %38, %40, %cst_29 {dimension_numbers = #tpu.dot_dimension_numbers<[1], [1], [0], [0], [0, 0, 1, 0], [], []>} : vector<8x8xbf16>, vector<8x8xbf16>, vector<8x8xf32> -> vector<8x8xf32>
    %44 = arith.addf %43, %35 : vector<8x8xf32>
    %cst_30 = arith.constant dense<0xFF800000> : vector<8xf32>
    %45 = vector.multi_reduction <maximumf>, %44, %cst_30 [1] : vector<8x8xf32> to vector<8xf32>
    %46 = vector.shape_cast %45 : vector<8xf32> to vector<8x1xf32>
    %47 = vector.broadcast %46 : vector<8x1xf32> to vector<8x8xf32>
    %48 = arith.subf %44, %47 : vector<8x8xf32>
    %49 = math.exp %48 : vector<8x8xf32>
    %cst_31 = arith.constant dense<0.000000e+00> : vector<8xf32>
    %50 = vector.multi_reduction <add>, %49, %cst_31 [1] : vector<8x8xf32> to vector<8xf32>
    %51 = vector.shape_cast %50 : vector<8xf32> to vector<8x1xf32>
    %52 = tpu.reciprocal %51 {approx = true} : vector<8x1xf32> -> vector<8x1xf32>
    %53 = vector.broadcast %52 : vector<8x1xf32> to vector<8x8xf32>
    %54 = arith.mulf %49, %53 : vector<8x8xf32>
    %55 = arith.truncf %54 : vector<8x8xf32> to vector<8x8xbf16>
    %cst_32 = arith.constant dense<0.000000e+00> : vector<8x8xf32>
    %56 = tpu.matmul %55, %42, %cst_32 {dimension_numbers = #tpu.dot_dimension_numbers<[1], [0], [0], [1], [0, 0, 1, 1], [], []>} : vector<8x8xbf16>, vector<8x8xbf16>, vector<8x8xf32> -> vector<8x8xf32>
    %57 = arith.truncf %56 : vector<8x8xf32> to vector<8x8xbf16>
    %c0_33 = arith.constant 0 : index
    %c0_34 = arith.constant 0 : index
    %58 = vector.load %arg7[%c0_33, %c0_34] : memref<32x32xbf16, #tpu.memory_space<vmem>>, vector<8x32xbf16>
    %cst_35 = arith.constant dense<0.000000e+00> : vector<8x32xf32>
    %59 = tpu.matmul %57, %58, %cst_35 {dimension_numbers = #tpu.dot_dimension_numbers<[1], [0], [0], [1], [0, 0, 1, 1], [], []>} : vector<8x8xbf16>, vector<8x32xbf16>, vector<8x32xf32> -> vector<8x32xf32>
    %60 = arith.addf %36, %59 : vector<8x32xf32>
    %61 = vector.extract_strided_slice %12 {offsets = [0, 8], sizes = [8, 8], strides = [1, 1]} : vector<8x32xf32> to vector<8x8xf32>
    %62 = arith.truncf %61 : vector<8x8xf32> to vector<8x8xbf16>
    %63 = vector.extract_strided_slice %19 {offsets = [0, 8], sizes = [8, 8], strides = [1, 1]} : vector<8x32xf32> to vector<8x8xf32>
    %64 = arith.truncf %63 : vector<8x8xf32> to vector<8x8xbf16>
    %65 = vector.extract_strided_slice %26 {offsets = [0, 8], sizes = [8, 8], strides = [1, 1]} : vector<8x32xf32> to vector<8x8xf32>
    %66 = arith.truncf %65 : vector<8x8xf32> to vector<8x8xbf16>
    %cst_36 = arith.constant dense<0.000000e+00> : vector<8x8xf32>
    %67 = tpu.matmul %62, %64, %cst_36 {dimension_numbers = #tpu.dot_dimension_numbers<[1], [1], [0], [0], [0, 0, 1, 0], [], []>} : vector<8x8xbf16>, vector<8x8xbf16>, vector<8x8xf32> -> vector<8x8xf32>
    %68 = arith.addf %67, %35 : vector<8x8xf32>
    %cst_37 = arith.constant dense<0xFF800000> : vector<8xf32>
    %69 = vector.multi_reduction <maximumf>, %68, %cst_37 [1] : vector<8x8xf32> to vector<8xf32>
    %70 = vector.shape_cast %69 : vector<8xf32> to vector<8x1xf32>
    %71 = vector.broadcast %70 : vector<8x1xf32> to vector<8x8xf32>
    %72 = arith.subf %68, %71 : vector<8x8xf32>
    %73 = math.exp %72 : vector<8x8xf32>
    %cst_38 = arith.constant dense<0.000000e+00> : vector<8xf32>
    %74 = vector.multi_reduction <add>, %73, %cst_38 [1] : vector<8x8xf32> to vector<8xf32>
    %75 = vector.shape_cast %74 : vector<8xf32> to vector<8x1xf32>
    %76 = tpu.reciprocal %75 {approx = true} : vector<8x1xf32> -> vector<8x1xf32>
    %77 = vector.broadcast %76 : vector<8x1xf32> to vector<8x8xf32>
    %78 = arith.mulf %73, %77 : vector<8x8xf32>
    %79 = arith.truncf %78 : vector<8x8xf32> to vector<8x8xbf16>
    %cst_39 = arith.constant dense<0.000000e+00> : vector<8x8xf32>
    %80 = tpu.matmul %79, %66, %cst_39 {dimension_numbers = #tpu.dot_dimension_numbers<[1], [0], [0], [1], [0, 0, 1, 1], [], []>} : vector<8x8xbf16>, vector<8x8xbf16>, vector<8x8xf32> -> vector<8x8xf32>
    %81 = arith.truncf %80 : vector<8x8xf32> to vector<8x8xbf16>
    %c8 = arith.constant 8 : index
    %c0_40 = arith.constant 0 : index
    %82 = vector.load %arg7[%c8, %c0_40] : memref<32x32xbf16, #tpu.memory_space<vmem>>, vector<8x32xbf16>
    %cst_41 = arith.constant dense<0.000000e+00> : vector<8x32xf32>
    %83 = tpu.matmul %81, %82, %cst_41 {dimension_numbers = #tpu.dot_dimension_numbers<[1], [0], [0], [1], [0, 0, 1, 1], [], []>} : vector<8x8xbf16>, vector<8x32xbf16>, vector<8x32xf32> -> vector<8x32xf32>
    %84 = arith.addf %60, %83 : vector<8x32xf32>
    %85 = vector.extract_strided_slice %12 {offsets = [0, 16], sizes = [8, 8], strides = [1, 1]} : vector<8x32xf32> to vector<8x8xf32>
    %86 = arith.truncf %85 : vector<8x8xf32> to vector<8x8xbf16>
    %87 = vector.extract_strided_slice %19 {offsets = [0, 16], sizes = [8, 8], strides = [1, 1]} : vector<8x32xf32> to vector<8x8xf32>
    %88 = arith.truncf %87 : vector<8x8xf32> to vector<8x8xbf16>
    %89 = vector.extract_strided_slice %26 {offsets = [0, 16], sizes = [8, 8], strides = [1, 1]} : vector<8x32xf32> to vector<8x8xf32>
    %90 = arith.truncf %89 : vector<8x8xf32> to vector<8x8xbf16>
    %cst_42 = arith.constant dense<0.000000e+00> : vector<8x8xf32>
    %91 = tpu.matmul %86, %88, %cst_42 {dimension_numbers = #tpu.dot_dimension_numbers<[1], [1], [0], [0], [0, 0, 1, 0], [], []>} : vector<8x8xbf16>, vector<8x8xbf16>, vector<8x8xf32> -> vector<8x8xf32>
    %92 = arith.addf %91, %35 : vector<8x8xf32>
    %cst_43 = arith.constant dense<0xFF800000> : vector<8xf32>
    %93 = vector.multi_reduction <maximumf>, %92, %cst_43 [1] : vector<8x8xf32> to vector<8xf32>
    %94 = vector.shape_cast %93 : vector<8xf32> to vector<8x1xf32>
    %95 = vector.broadcast %94 : vector<8x1xf32> to vector<8x8xf32>
    %96 = arith.subf %92, %95 : vector<8x8xf32>
    %97 = math.exp %96 : vector<8x8xf32>
    %cst_44 = arith.constant dense<0.000000e+00> : vector<8xf32>
    %98 = vector.multi_reduction <add>, %97, %cst_44 [1] : vector<8x8xf32> to vector<8xf32>
    %99 = vector.shape_cast %98 : vector<8xf32> to vector<8x1xf32>
    %100 = tpu.reciprocal %99 {approx = true} : vector<8x1xf32> -> vector<8x1xf32>
    %101 = vector.broadcast %100 : vector<8x1xf32> to vector<8x8xf32>
    %102 = arith.mulf %97, %101 : vector<8x8xf32>
    %103 = arith.truncf %102 : vector<8x8xf32> to vector<8x8xbf16>
    %cst_45 = arith.constant dense<0.000000e+00> : vector<8x8xf32>
    %104 = tpu.matmul %103, %90, %cst_45 {dimension_numbers = #tpu.dot_dimension_numbers<[1], [0], [0], [1], [0, 0, 1, 1], [], []>} : vector<8x8xbf16>, vector<8x8xbf16>, vector<8x8xf32> -> vector<8x8xf32>
    %105 = arith.truncf %104 : vector<8x8xf32> to vector<8x8xbf16>
    %c16 = arith.constant 16 : index
    %c0_46 = arith.constant 0 : index
    %106 = vector.load %arg7[%c16, %c0_46] : memref<32x32xbf16, #tpu.memory_space<vmem>>, vector<8x32xbf16>
    %cst_47 = arith.constant dense<0.000000e+00> : vector<8x32xf32>
    %107 = tpu.matmul %105, %106, %cst_47 {dimension_numbers = #tpu.dot_dimension_numbers<[1], [0], [0], [1], [0, 0, 1, 1], [], []>} : vector<8x8xbf16>, vector<8x32xbf16>, vector<8x32xf32> -> vector<8x32xf32>
    %108 = arith.addf %84, %107 : vector<8x32xf32>
    %109 = vector.extract_strided_slice %12 {offsets = [0, 24], sizes = [8, 8], strides = [1, 1]} : vector<8x32xf32> to vector<8x8xf32>
    %110 = arith.truncf %109 : vector<8x8xf32> to vector<8x8xbf16>
    %111 = vector.extract_strided_slice %19 {offsets = [0, 24], sizes = [8, 8], strides = [1, 1]} : vector<8x32xf32> to vector<8x8xf32>
    %112 = arith.truncf %111 : vector<8x8xf32> to vector<8x8xbf16>
    %113 = vector.extract_strided_slice %26 {offsets = [0, 24], sizes = [8, 8], strides = [1, 1]} : vector<8x32xf32> to vector<8x8xf32>
    %114 = arith.truncf %113 : vector<8x8xf32> to vector<8x8xbf16>
    %cst_48 = arith.constant dense<0.000000e+00> : vector<8x8xf32>
    %115 = tpu.matmul %110, %112, %cst_48 {dimension_numbers = #tpu.dot_dimension_numbers<[1], [1], [0], [0], [0, 0, 1, 0], [], []>} : vector<8x8xbf16>, vector<8x8xbf16>, vector<8x8xf32> -> vector<8x8xf32>
    %116 = arith.addf %115, %35 : vector<8x8xf32>
    %cst_49 = arith.constant dense<0xFF800000> : vector<8xf32>
    %117 = vector.multi_reduction <maximumf>, %116, %cst_49 [1] : vector<8x8xf32> to vector<8xf32>
    %118 = vector.shape_cast %117 : vector<8xf32> to vector<8x1xf32>
    %119 = vector.broadcast %118 : vector<8x1xf32> to vector<8x8xf32>
    %120 = arith.subf %116, %119 : vector<8x8xf32>
    %121 = math.exp %120 : vector<8x8xf32>
    %cst_50 = arith.constant dense<0.000000e+00> : vector<8xf32>
    %122 = vector.multi_reduction <add>, %121, %cst_50 [1] : vector<8x8xf32> to vector<8xf32>
    %123 = vector.shape_cast %122 : vector<8xf32> to vector<8x1xf32>
    %124 = tpu.reciprocal %123 {approx = true} : vector<8x1xf32> -> vector<8x1xf32>
    %125 = vector.broadcast %124 : vector<8x1xf32> to vector<8x8xf32>
    %126 = arith.mulf %121, %125 : vector<8x8xf32>
    %127 = arith.truncf %126 : vector<8x8xf32> to vector<8x8xbf16>
    %cst_51 = arith.constant dense<0.000000e+00> : vector<8x8xf32>
    %128 = tpu.matmul %127, %114, %cst_51 {dimension_numbers = #tpu.dot_dimension_numbers<[1], [0], [0], [1], [0, 0, 1, 1], [], []>} : vector<8x8xbf16>, vector<8x8xbf16>, vector<8x8xf32> -> vector<8x8xf32>
    %129 = arith.truncf %128 : vector<8x8xf32> to vector<8x8xbf16>
    %c24 = arith.constant 24 : index
    %c0_52 = arith.constant 0 : index
    %130 = vector.load %arg7[%c24, %c0_52] : memref<32x32xbf16, #tpu.memory_space<vmem>>, vector<8x32xbf16>
    %cst_53 = arith.constant dense<0.000000e+00> : vector<8x32xf32>
    %131 = tpu.matmul %129, %130, %cst_53 {dimension_numbers = #tpu.dot_dimension_numbers<[1], [0], [0], [1], [0, 0, 1, 1], [], []>} : vector<8x8xbf16>, vector<8x32xbf16>, vector<8x32xf32> -> vector<8x32xf32>
    %132 = arith.addf %108, %131 : vector<8x32xf32>
    %c0_54 = arith.constant 0 : index
    %c0_55 = arith.constant 0 : index
    %133 = vector.load %arg8[%c0_54, %c0_55] : memref<1x32xf32, #tpu.memory_space<vmem>>, vector<1x32xf32>
    %134 = vector.broadcast %133 : vector<1x32xf32> to vector<8x32xf32>
    %135 = arith.addf %132, %134 : vector<8x32xf32>
    %c0_56 = arith.constant 0 : index
    %c0_57 = arith.constant 0 : index
    %c0_58 = arith.constant 0 : index
    %136 = vector.load %arg9[%c0_56, %c0_57, %c0_58] : memref<1x8x32xf32, #tpu.memory_space<vmem>>, vector<1x8x32xf32>
    %137 = vector.shape_cast %136 : vector<1x8x32xf32> to vector<8x32xf32>
    %138 = vector.shape_cast %135 : vector<8x32xf32> to vector<1x8x32xf32>
    tpu.vector_store %arg9[%c0_56, %c0_57, %c0_58], %138 {strides = array<i32>} : memref<1x8x32xf32, #tpu.memory_space<vmem>>, vector<1x8x32xf32>,
    return
  }
  func.func @transform_0(%arg0: i32, %arg1: i32) -> (i32, i32, i32) {
    %c0_i32 = arith.constant 0 : i32
    %c0_i32_0 = arith.constant 0 : i32
    return %arg0, %arg1, %c0_i32 : i32, i32, i32
  }
  func.func @transform_1(%arg0: i32, %arg1: i32) -> (i32, i32, i32) {
    %c0_i32 = arith.constant 0 : i32
    %c0_i32_0 = arith.constant 0 : i32
    %c0_i32_1 = arith.constant 0 : i32
    return %arg0, %c0_i32, %c0_i32_0 : i32, i32, i32
  }
  func.func @transform_2(%arg0: i32, %arg1: i32) -> (i32, i32, i32) {
    %c0_i32 = arith.constant 0 : i32
    %c0_i32_0 = arith.constant 0 : i32
    %c0_i32_1 = arith.constant 0 : i32
    return %arg0, %c0_i32, %c0_i32_0 : i32, i32, i32
  }
  func.func @transform_3(%arg0: i32, %arg1: i32) -> (i32, i32, i32) {
    %c0_i32 = arith.constant 0 : i32
    %c0_i32_0 = arith.constant 0 : i32
    %c0_i32_1 = arith.constant 0 : i32
    %c0_i32_2 = arith.constant 0 : i32
    return %c0_i32, %c0_i32_0, %c0_i32_1 : i32, i32, i32
  }
  func.func @transform_4(%arg0: i32, %arg1: i32) -> (i32, i32, i32) {
    %c0_i32 = arith.constant 0 : i32
    %c0_i32_0 = arith.constant 0 : i32
    %c0_i32_1 = arith.constant 0 : i32
    %c0_i32_2 = arith.constant 0 : i32
    return %c0_i32, %c0_i32_0, %c0_i32_1 : i32, i32, i32
  }
  func.func @transform_5(%arg0: i32, %arg1: i32) -> (i32, i32) {
    %c0_i32 = arith.constant 0 : i32
    %c0_i32_0 = arith.constant 0 : i32
    %c0_i32_1 = arith.constant 0 : i32
    return %c0_i32, %c0_i32_0 : i32, i32
  }
  func.func @transform_6(%arg0: i32, %arg1: i32) -> (i32, i32) {
    %c0_i32 = arith.constant 0 : i32
    %c0_i32_0 = arith.constant 0 : i32
    %c0_i32_1 = arith.constant 0 : i32
    return %c0_i32, %c0_i32_0 : i32, i32
  }
  func.func @transform_7(%arg0: i32, %arg1: i32) -> (i32, i32, i32) {
    %c0_i32 = arith.constant 0 : i32
    %c0_i32_0 = arith.constant 0 : i32
    return %arg0, %arg1, %c0_i32 : i32, i32, i32
  }
}

module attributes {stable_mosaic.version = 11 : i64} {
  func.func @_mha_fused_kernel(%arg0: i32, %arg1: i32, %arg2: memref<1x8x32xbf16, #tpu.memory_space<vmem>>, %arg3: memref<1x8x32xbf16, #tpu.memory_space<vmem>>, %arg4: memref<1x8x32xbf16, #tpu.memory_space<vmem>>, %arg5: memref<3x32x32xbf16, #tpu.memory_space<vmem>>, %arg6: memref<3x1x32xf32, #tpu.memory_space<vmem>>, %arg7: memref<32x32xbf16, #tpu.memory_space<vmem>>, %arg8: memref<1x32xf32, #tpu.memory_space<vmem>>, %arg9: memref<1x8x32xf32, #tpu.memory_space<vmem>>) attributes {dimension_semantics = [#tpu.dimension_semantics<parallel>, #tpu.dimension_semantics<parallel>], iteration_bounds = array<i64: 2, 1>, scalar_prefetch = 0 : i64, scratch_operands = 0 : i64, tpu.core_type = #tpu.core_type<tc>, window_params = [{transform_indices = @transform_0, window_bounds = array<i64: 1, 8, 32>}, {transform_indices = @transform_1, window_bounds = array<i64: 1, 8, 32>}, {transform_indices = @transform_2, window_bounds = array<i64: 1, 8, 32>}, {pipeline_mode = #tpu.pipeline_mode<synchronous>, transform_indices = @transform_3, window_bounds = array<i64: 3, 32, 32>}, {pipeline_mode = #tpu.pipeline_mode<synchronous>, transform_indices = @transform_4, window_bounds = array<i64: 3, 1, 32>}, {pipeline_mode = #tpu.pipeline_mode<synchronous>, transform_indices = @transform_5, window_bounds = array<i64: 32, 32>}, {pipeline_mode = #tpu.pipeline_mode<synchronous>, transform_indices = @transform_6, window_bounds = array<i64: 1, 32>}, {transform_indices = @transform_7, window_bounds = array<i64: 1, 8, 32>}]} {
    %c0 = arith.constant 0 : index
    %c0_0 = arith.constant 0 : index
    %c0_1 = arith.constant 0 : index
    %0 = vector.load %arg2[%c0, %c0_0, %c0_1] : memref<1x8x32xbf16, #tpu.memory_space<vmem>>, vector<1x8x32xbf16>
    %1 = vector.shape_cast %0 : vector<1x8x32xbf16> to vector<8x32xbf16>
    %c0_2 = arith.constant 0 : index
    %c0_3 = arith.constant 0 : index
    %c0_4 = arith.constant 0 : index
    %2 = vector.load %arg3[%c0_2, %c0_3, %c0_4] : memref<1x8x32xbf16, #tpu.memory_space<vmem>>, vector<1x8x32xbf16>
    %3 = vector.shape_cast %2 : vector<1x8x32xbf16> to vector<8x32xbf16>
    %c0_5 = arith.constant 0 : index
    %c0_6 = arith.constant 0 : index
    %c0_7 = arith.constant 0 : index
    %4 = vector.load %arg4[%c0_5, %c0_6, %c0_7] : memref<1x8x32xbf16, #tpu.memory_space<vmem>>, vector<1x8x32xbf16>
    %5 = vector.shape_cast %4 : vector<1x8x32xbf16> to vector<8x32xbf16>
    %c0_8 = arith.constant 0 : index
    %c0_9 = arith.constant 0 : index
    %c0_10 = arith.constant 0 : index
    %6 = vector.load %arg5[%c0_8, %c0_9, %c0_10] : memref<3x32x32xbf16, #tpu.memory_space<vmem>>, vector<1x32x32xbf16>
    %7 = vector.shape_cast %6 : vector<1x32x32xbf16> to vector<32x32xbf16>
    %cst = arith.constant dense<0.000000e+00> : vector<8x32xf32>
    %8 = tpu.matmul %1, %7, %cst {dimension_numbers = #tpu.dot_dimension_numbers<[1], [0], [0], [1], [0, 0, 1, 1], [], []>} : vector<8x32xbf16>, vector<32x32xbf16>, vector<8x32xf32> -> vector<8x32xf32>
    %c0_11 = arith.constant 0 : index
    %c0_12 = arith.constant 0 : index
    %c0_13 = arith.constant 0 : index
    %9 = vector.load %arg6[%c0_11, %c0_12, %c0_13] : memref<3x1x32xf32, #tpu.memory_space<vmem>>, vector<1x1x32xf32>
    %10 = vector.shape_cast %9 : vector<1x1x32xf32> to vector<1x32xf32>
    %11 = vector.broadcast %10 : vector<1x32xf32> to vector<8x32xf32>
    %12 = arith.addf %8, %11 : vector<8x32xf32>
    %c1 = arith.constant 1 : index
    %c0_14 = arith.constant 0 : index
    %c0_15 = arith.constant 0 : index
    %13 = vector.load %arg5[%c1, %c0_14, %c0_15] : memref<3x32x32xbf16, #tpu.memory_space<vmem>>, vector<1x32x32xbf16>
    %14 = vector.shape_cast %13 : vector<1x32x32xbf16> to vector<32x32xbf16>
    %cst_16 = arith.constant dense<0.000000e+00> : vector<8x32xf32>
    %15 = tpu.matmul %3, %14, %cst_16 {dimension_numbers = #tpu.dot_dimension_numbers<[1], [0], [0], [1], [0, 0, 1, 1], [], []>} : vector<8x32xbf16>, vector<32x32xbf16>, vector<8x32xf32> -> vector<8x32xf32>
    %c1_17 = arith.constant 1 : index
    %c0_18 = arith.constant 0 : index
    %c0_19 = arith.constant 0 : index
    %16 = vector.load %arg6[%c1_17, %c0_18, %c0_19] : memref<3x1x32xf32, #tpu.memory_space<vmem>>, vector<1x1x32xf32>
    %17 = vector.shape_cast %16 : vector<1x1x32xf32> to vector<1x32xf32>
    %18 = vector.broadcast %17 : vector<1x32xf32> to vector<8x32xf32>
    %19 = arith.addf %15, %18 : vector<8x32xf32>
    %c2 = arith.constant 2 : index
    %c0_20 = arith.constant 0 : index
    %c0_21 = arith.constant 0 : index
    %20 = vector.load %arg5[%c2, %c0_20, %c0_21] : memref<3x32x32xbf16, #tpu.memory_space<vmem>>, vector<1x32x32xbf16>
    %21 = vector.shape_cast %20 : vector<1x32x32xbf16> to vector<32x32xbf16>
    %cst_22 = arith.constant dense<0.000000e+00> : vector<8x32xf32>
    %22 = tpu.matmul %5, %21, %cst_22 {dimension_numbers = #tpu.dot_dimension_numbers<[1], [0], [0], [1], [0, 0, 1, 1], [], []>} : vector<8x32xbf16>, vector<32x32xbf16>, vector<8x32xf32> -> vector<8x32xf32>
    %c2_23 = arith.constant 2 : index
    %c0_24 = arith.constant 0 : index
    %c0_25 = arith.constant 0 : index
    %23 = vector.load %arg6[%c2_23, %c0_24, %c0_25] : memref<3x1x32xf32, #tpu.memory_space<vmem>>, vector<1x1x32xf32>
    %24 = vector.shape_cast %23 : vector<1x1x32xf32> to vector<1x32xf32>
    %25 = vector.broadcast %24 : vector<1x32xf32> to vector<8x32xf32>
    %26 = arith.addf %22, %25 : vector<8x32xf32>
    %c8_i32 = arith.constant 8 : i32
    %27 = arith.muli %arg1, %c8_i32 : i32
    %28 = tpu.iota {dimensions = array<i32: 0>} : vector<8x8xi32>
    %29 = vector.broadcast %27 : i32 to vector<8x8xi32>
    %30 = arith.addi %29, %28 : vector<8x8xi32>
    %31 = tpu.iota {dimensions = array<i32: 1>} : vector<8x8xi32>
    %32 = arith.cmpi sgt, %31, %30 : vector<8x8xi32>
    %cst_26 = arith.constant -1.000000e+09 : f32
    %cst_27 = arith.constant 0.000000e+00 : f32
    %33 = vector.broadcast %cst_26 : f32 to vector<8x8xf32>
    %34 = vector.broadcast %cst_27 : f32 to vector<8x8xf32>
    %35 = arith.select %32, %33, %34 : vector<8x8xi1>, vector<8x8xf32>
    %cst_28 = arith.constant 0.000000e+00 : f32
    %36 = vector.broadcast %cst_28 : f32 to vector<8x32xf32>
    %37 = vector.extract_strided_slice %12 {offsets = [0, 0], sizes = [8, 8], strides = [1, 1]} : vector<8x32xf32> to vector<8x8xf32>
    %38 = arith.truncf %37 : vector<8x8xf32> to vector<8x8xbf16>
    %39 = vector.extract_strided_slice %19 {offsets = [0, 0], sizes = [8, 8], strides = [1, 1]} : vector<8x32xf32> to vector<8x8xf32>
    %40 = arith.truncf %39 : vector<8x8xf32> to vector<8x8xbf16>
    %41 = vector.extract_strided_slice %26 {offsets = [0, 0], sizes = [8, 8], strides = [1, 1]} : vector<8x32xf32> to vector<8x8xf32>
    %42 = arith.truncf %41 : vector<8x8xf32> to vector<8x8xbf16>
    %cst_29 = arith.constant dense<0.000000e+00> : vector<8x8xf32>
    %43 = tpu.matmul %38, %40, %cst_29 {dimension_numbers = #tpu.dot_dimension_numbers<[1], [1], [0], [0], [0, 0, 1, 0], [], []>} : vector<8x8xbf16>, vector<8x8xbf16>, vector<8x8xf32> -> vector<8x8xf32>
    %44 = arith.addf %43, %35 : vector<8x8xf32>
    %cst_30 = arith.constant dense<0xFF800000> : vector<8xf32>
    %45 = vector.multi_reduction <maximumf>, %44, %cst_30 [1] : vector<8x8xf32> to vector<8xf32>
    %46 = vector.shape_cast %45 : vector<8xf32> to vector<8x1xf32>
    %47 = vector.broadcast %46 : vector<8x1xf32> to vector<8x8xf32>
    %48 = arith.subf %44, %47 : vector<8x8xf32>
    %49 = math.exp %48 : vector<8x8xf32>
    %cst_31 = arith.constant dense<0.000000e+00> : vector<8xf32>
    %50 = vector.multi_reduction <add>, %49, %cst_31 [1] : vector<8x8xf32> to vector<8xf32>
    %51 = vector.shape_cast %50 : vector<8xf32> to vector<8x1xf32>
    %52 = tpu.reciprocal %51 {approx = true} : vector<8x1xf32> -> vector<8x1xf32>
    %53 = vector.broadcast %52 : vector<8x1xf32> to vector<8x8xf32>
    %54 = arith.mulf %49, %53 : vector<8x8xf32>
    %55 = arith.truncf %54 : vector<8x8xf32> to vector<8x8xbf16>
    %cst_32 = arith.constant dense<0.000000e+00> : vector<8x8xf32>
    %56 = tpu.matmul %55, %42, %cst_32 {dimension_numbers = #tpu.dot_dimension_numbers<[1], [0], [0], [1], [0, 0, 1, 1], [], []>} : vector<8x8xbf16>, vector<8x8xbf16>, vector<8x8xf32> -> vector<8x8xf32>
    %57 = arith.truncf %56 : vector<8x8xf32> to vector<8x8xbf16>
    %c0_33 = arith.constant 0 : index
    %c0_34 = arith.constant 0 : index
    %58 = vector.load %arg7[%c0_33, %c0_34] : memref<32x32xbf16, #tpu.memory_space<vmem>>, vector<8x32xbf16>
    %cst_35 = arith.constant dense<0.000000e+00> : vector<8x32xf32>
    %59 = tpu.matmul %57, %58, %cst_35 {dimension_numbers = #tpu.dot_dimension_numbers<[1], [0], [0], [1], [0, 0, 1, 1], [], []>} : vector<8x8xbf16>, vector<8x32xbf16>, vector<8x32xf32> -> vector<8x32xf32>
    %60 = arith.addf %36, %59 : vector<8x32xf32>
    %61 = vector.extract_strided_slice %12 {offsets = [0, 8], sizes = [8, 8], strides = [1, 1]} : vector<8x32xf32> to vector<8x8xf32>
    %62 = arith.truncf %61 : vector<8x8xf32> to vector<8x8xbf16>
    %63 = vector.extract_strided_slice %19 {offsets = [0, 8], sizes = [8, 8], strides = [1, 1]} : vector<8x32xf32> to vector<8x8xf32>
    %64 = arith.truncf %63 : vector<8x8xf32> to vector<8x8xbf16>
    %65 = vector.extract_strided_slice %26 {offsets = [0, 8], sizes = [8, 8], strides = [1, 1]} : vector<8x32xf32> to vector<8x8xf32>
    %66 = arith.truncf %65 : vector<8x8xf32> to vector<8x8xbf16>
    %cst_36 = arith.constant dense<0.000000e+00> : vector<8x8xf32>
    %67 = tpu.matmul %62, %64, %cst_36 {dimension_numbers = #tpu.dot_dimension_numbers<[1], [1], [0], [0], [0, 0, 1, 0], [], []>} : vector<8x8xbf16>, vector<8x8xbf16>, vector<8x8xf32> -> vector<8x8xf32>
    %68 = arith.addf %67, %35 : vector<8x8xf32>
    %cst_37 = arith.constant dense<0xFF800000> : vector<8xf32>
    %69 = vector.multi_reduction <maximumf>, %68, %cst_37 [1] : vector<8x8xf32> to vector<8xf32>
    %70 = vector.shape_cast %69 : vector<8xf32> to vector<8x1xf32>
    %71 = vector.broadcast %70 : vector<8x1xf32> to vector<8x8xf32>
    %72 = arith.subf %68, %71 : vector<8x8xf32>
    %73 = math.exp %72 : vector<8x8xf32>
    %cst_38 = arith.constant dense<0.000000e+00> : vector<8xf32>
    %74 = vector.multi_reduction <add>, %73, %cst_38 [1] : vector<8x8xf32> to vector<8xf32>
    %75 = vector.shape_cast %74 : vector<8xf32> to vector<8x1xf32>
    %76 = tpu.reciprocal %75 {approx = true} : vector<8x1xf32> -> vector<8x1xf32>
    %77 = vector.broadcast %76 : vector<8x1xf32> to vector<8x8xf32>
    %78 = arith.mulf %73, %77 : vector<8x8xf32>
    %79 = arith.truncf %78 : vector<8x8xf32> to vector<8x8xbf16>
    %cst_39 = arith.constant dense<0.000000e+00> : vector<8x8xf32>
    %80 = tpu.matmul %79, %66, %cst_39 {dimension_numbers = #tpu.dot_dimension_numbers<[1], [0], [0], [1], [0, 0, 1, 1], [], []>} : vector<8x8xbf16>, vector<8x8xbf16>, vector<8x8xf32> -> vector<8x8xf32>
    %81 = arith.truncf %80 : vector<8x8xf32> to vector<8x8xbf16>
    %c8 = arith.constant 8 : index
    %c0_40 = arith.constant 0 : index
    %82 = vector.load %arg7[%c8, %c0_40] : memref<32x32xbf16, #tpu.memory_space<vmem>>, vector<8x32xbf16>
    %cst_41 = arith.constant dense<0.000000e+00> : vector<8x32xf32>
    %83 = tpu.matmul %81, %82, %cst_41 {dimension_numbers = #tpu.dot_dimension_numbers<[1], [0], [0], [1], [0, 0, 1, 1], [], []>} : vector<8x8xbf16>, vector<8x32xbf16>, vector<8x32xf32> -> vector<8x32xf32>
    %84 = arith.addf %60, %83 : vector<8x32xf32>
    %85 = vector.extract_strided_slice %12 {offsets = [0, 16], sizes = [8, 8], strides = [1, 1]} : vector<8x32xf32> to vector<8x8xf32>
    %86 = arith.truncf %85 : vector<8x8xf32> to vector<8x8xbf16>
    %87 = vector.extract_strided_slice %19 {offsets = [0, 16], sizes = [8, 8], strides = [1, 1]} : vector<8x32xf32> to vector<8x8xf32>
    %88 = arith.truncf %87 : vector<8x8xf32> to vector<8x8xbf16>
    %89 = vector.extract_strided_slice %26 {offsets = [0, 16], sizes = [8, 8], strides = [1, 1]} : vector<8x32xf32> to vector<8x8xf32>
    %90 = arith.truncf %89 : vector<8x8xf32> to vector<8x8xbf16>
    %cst_42 = arith.constant dense<0.000000e+00> : vector<8x8xf32>
    %91 = tpu.matmul %86, %88, %cst_42 {dimension_numbers = #tpu.dot_dimension_numbers<[1], [1], [0], [0], [0, 0, 1, 0], [], []>} : vector<8x8xbf16>, vector<8x8xbf16>, vector<8x8xf32> -> vector<8x8xf32>
    %92 = arith.addf %91, %35 : vector<8x8xf32>
    %cst_43 = arith.constant dense<0xFF800000> : vector<8xf32>
    %93 = vector.multi_reduction <maximumf>, %92, %cst_43 [1] : vector<8x8xf32> to vector<8xf32>
    %94 = vector.shape_cast %93 : vector<8xf32> to vector<8x1xf32>
    %95 = vector.broadcast %94 : vector<8x1xf32> to vector<8x8xf32>
    %96 = arith.subf %92, %95 : vector<8x8xf32>
    %97 = math.exp %96 : vector<8x8xf32>
    %cst_44 = arith.constant dense<0.000000e+00> : vector<8xf32>
    %98 = vector.multi_reduction <add>, %97, %cst_44 [1] : vector<8x8xf32> to vector<8xf32>
    %99 = vector.shape_cast %98 : vector<8xf32> to vector<8x1xf32>
    %100 = tpu.reciprocal %99 {approx = true} : vector<8x1xf32> -> vector<8x1xf32>
    %101 = vector.broadcast %100 : vector<8x1xf32> to vector<8x8xf32>
    %102 = arith.mulf %97, %101 : vector<8x8xf32>
    %103 = arith.truncf %102 : vector<8x8xf32> to vector<8x8xbf16>
    %cst_45 = arith.constant dense<0.000000e+00> : vector<8x8xf32>
    %104 = tpu.matmul %103, %90, %cst_45 {dimension_numbers = #tpu.dot_dimension_numbers<[1], [0], [0], [1], [0, 0, 1, 1], [], []>} : vector<8x8xbf16>, vector<8x8xbf16>, vector<8x8xf32> -> vector<8x8xf32>
    %105 = arith.truncf %104 : vector<8x8xf32> to vector<8x8xbf16>
    %c16 = arith.constant 16 : index
    %c0_46 = arith.constant 0 : index
    %106 = vector.load %arg7[%c16, %c0_46] : memref<32x32xbf16, #tpu.memory_space<vmem>>, vector<8x32xbf16>
    %cst_47 = arith.constant dense<0.000000e+00> : vector<8x32xf32>
    %107 = tpu.matmul %105, %106, %cst_47 {dimension_numbers = #tpu.dot_dimension_numbers<[1], [0], [0], [1], [0, 0, 1, 1], [], []>} : vector<8x8xbf16>, vector<8x32xbf16>, vector<8x32xf32> -> vector<8x32xf32>
    %108 = arith.addf %84, %107 : vector<8x32xf32>
    %109 = vector.extract_strided_slice %12 {offsets = [0, 24], sizes = [8, 8], strides = [1, 1]} : vector<8x32xf32> to vector<8x8xf32>
    %110 = arith.truncf %109 : vector<8x8xf32> to vector<8x8xbf16>
    %111 = vector.extract_strided_slice %19 {offsets = [0, 24], sizes = [8, 8], strides = [1, 1]} : vector<8x32xf32> to vector<8x8xf32>
    %112 = arith.truncf %111 : vector<8x8xf32> to vector<8x8xbf16>
    %113 = vector.extract_strided_slice %26 {offsets = [0, 24], sizes = [8, 8], strides = [1, 1]} : vector<8x32xf32> to vector<8x8xf32>
    %114 = arith.truncf %113 : vector<8x8xf32> to vector<8x8xbf16>
    %cst_48 = arith.constant dense<0.000000e+00> : vector<8x8xf32>
    %115 = tpu.matmul %110, %112, %cst_48 {dimension_numbers = #tpu.dot_dimension_numbers<[1], [1], [0], [0], [0, 0, 1, 0], [], []>} : vector<8x8xbf16>, vector<8x8xbf16>, vector<8x8xf32> -> vector<8x8xf32>
    %116 = arith.addf %115, %35 : vector<8x8xf32>
    %cst_49 = arith.constant dense<0xFF800000> : vector<8xf32>
    %117 = vector.multi_reduction <maximumf>, %116, %cst_49 [1] : vector<8x8xf32> to vector<8xf32>
    %118 = vector.shape_cast %117 : vector<8xf32> to vector<8x1xf32>
    %119 = vector.broadcast %118 : vector<8x1xf32> to vector<8x8xf32>
    %120 = arith.subf %116, %119 : vector<8x8xf32>
    %121 = math.exp %120 : vector<8x8xf32>
    %cst_50 = arith.constant dense<0.000000e+00> : vector<8xf32>
    %122 = vector.multi_reduction <add>, %121, %cst_50 [1] : vector<8x8xf32> to vector<8xf32>
    %123 = vector.shape_cast %122 : vector<8xf32> to vector<8x1xf32>
    %124 = tpu.reciprocal %123 {approx = true} : vector<8x1xf32> -> vector<8x1xf32>
    %125 = vector.broadcast %124 : vector<8x1xf32> to vector<8x8xf32>
    %126 = arith.mulf %121, %125 : vector<8x8xf32>
    %127 = arith.truncf %126 : vector<8x8xf32> to vector<8x8xbf16>
    %cst_51 = arith.constant dense<0.000000e+00> : vector<8x8xf32>
    %128 = tpu.matmul %127, %114, %cst_51 {dimension_numbers = #tpu.dot_dimension_numbers<[1], [0], [0], [1], [0, 0, 1, 1], [], []>} : vector<8x8xbf16>, vector<8x8xbf16>, vector<8x8xf32> -> vector<8x8xf32>
    %129 = arith.truncf %128 : vector<8x8xf32> to vector<8x8xbf16>
    %c24 = arith.constant 24 : index
    %c0_52 = arith.constant 0 : index
    %130 = vector.load %arg7[%c24, %c0_52] : memref<32x32xbf16, #tpu.memory_space<vmem>>, vector<8x32xbf16>
    %cst_53 = arith.constant dense<0.000000e+00> : vector<8x32xf32>
    %131 = tpu.matmul %129, %130, %cst_53 {dimension_numbers = #tpu.dot_dimension_numbers<[1], [0], [0], [1], [0, 0, 1, 1], [], []>} : vector<8x8xbf16>, vector<8x32xbf16>, vector<8x32xf32> -> vector<8x32xf32>
    %132 = arith.addf %108, %131 : vector<8x32xf32>
    %c0_54 = arith.constant 0 : index
    %c0_55 = arith.constant 0 : index
    %133 = vector.load %arg8[%c0_54, %c0_55] : memref<1x32xf32, #tpu.memory_space<vmem>>, vector<1x32xf32>
    %134 = vector.broadcast %133 : vector<1x32xf32> to vector<8x32xf32>
    %135 = arith.addf %132, %134 : vector<8x32xf32>
    %c0_56 = arith.constant 0 : index
    %c0_57 = arith.constant 0 : index
    %c0_58 = arith.constant 0 : index
    %136 = vector.load %arg9[%c0_56, %c0_57, %c0_58] : memref<1x8x32xf32, #tpu.memory_space<vmem>>, vector<1x8x32xf32>
    %137 = vector.shape_cast %136 : vector<1x8x32xf32> to vector<8x32xf32>
    %138 = vector.shape_cast %135 : vector<8x32xf32> to vector<1x8x32xf32>
    tpu.vector_store %arg9[%c0_56, %c0_57, %c0_58], %138 {strides = array<i32>} : memref<1x8x32xf32, #tpu.memory_space<vmem>>, vector<1x8x32xf32>,
    return
  }
  func.func @transform_0(%arg0: i32, %arg1: i32) -> (i32, i32, i32) {
    %c0_i32 = arith.constant 0 : i32
    %c0_i32_0 = arith.constant 0 : i32
    return %arg0, %arg1, %c0_i32 : i32, i32, i32
  }
  func.func @transform_1(%arg0: i32, %arg1: i32) -> (i32, i32, i32) {
    %c0_i32 = arith.constant 0 : i32
    %c0_i32_0 = arith.constant 0 : i32
    %c0_i32_1 = arith.constant 0 : i32
    return %arg0, %c0_i32, %c0_i32_0 : i32, i32, i32
  }
  func.func @transform_2(%arg0: i32, %arg1: i32) -> (i32, i32, i32) {
    %c0_i32 = arith.constant 0 : i32
    %c0_i32_0 = arith.constant 0 : i32
    %c0_i32_1 = arith.constant 0 : i32
    return %arg0, %c0_i32, %c0_i32_0 : i32, i32, i32
  }
  func.func @transform_3(%arg0: i32, %arg1: i32) -> (i32, i32, i32) {
    %c0_i32 = arith.constant 0 : i32
    %c0_i32_0 = arith.constant 0 : i32
    %c0_i32_1 = arith.constant 0 : i32
    %c0_i32_2 = arith.constant 0 : i32
    return %c0_i32, %c0_i32_0, %c0_i32_1 : i32, i32, i32
  }
  func.func @transform_4(%arg0: i32, %arg1: i32) -> (i32, i32, i32) {
    %c0_i32 = arith.constant 0 : i32
    %c0_i32_0 = arith.constant 0 : i32
    %c0_i32_1 = arith.constant 0 : i32
    %c0_i32_2 = arith.constant 0 : i32
    return %c0_i32, %c0_i32_0, %c0_i32_1 : i32, i32, i32
  }
  func.func @transform_5(%arg0: i32, %arg1: i32) -> (i32, i32) {
    %c0_i32 = arith.constant 0 : i32
    %c0_i32_0 = arith.constant 0 : i32
    %c0_i32_1 = arith.constant 0 : i32
    return %c0_i32, %c0_i32_0 : i32, i32
  }
  func.func @transform_6(%arg0: i32, %arg1: i32) -> (i32, i32) {
    %c0_i32 = arith.constant 0 : i32
    %c0_i32_0 = arith.constant 0 : i32
    %c0_i32_1 = arith.constant 0 : i32
    return %c0_i32, %c0_i32_0 : i32, i32
  }
  func.func @transform_7(%arg0: i32, %arg1: i32) -> (i32, i32, i32) {
    %c0_i32 = arith.constant 0 : i32
    %c0_i32_0 = arith.constant 0 : i32
    return %arg0, %arg1, %c0_i32 : i32, i32, i32
  }
}

</mosaic_0001>

<llo_original>
// kernel: tpu_custom_call.1
$region0: #{tpu_custom_call.1}
  #allocation0 [shape = 'u32[]', space=smem, size = 0x4, offset = 0x4, fixed_abs, tag = 'smem constant byte address 0x4 - core index']
  #allocation1 [shape = 'u32[72,128]{1,0:T(1,128)}', space=vmem, size = 0x9000, scoped, tag = 'internal scratch']
  %s0 = inlined_call_operand.hbm [shape: bf16[2,8,32], index: 0, kind: input, shape index: {}]
  %s1 = inlined_call_operand.hbm [shape: bf16[2,8,32], index: 1, kind: input, shape index: {}]
  %s2 = inlined_call_operand.hbm [shape: bf16[2,8,32], index: 2, kind: input, shape index: {}]
  %s3 = inlined_call_operand.hbm [shape: bf16[3,32,32], index: 3, kind: input, shape index: {}]
  %s4 = inlined_call_operand.vmem [shape: f32[3,1,32], index: 4, kind: input, shape index: {}]
  %s5 = inlined_call_operand.hbm [shape: bf16[32,32], index: 5, kind: input, shape index: {}]
  %s6 = inlined_call_operand.vmem [shape: f32[1,32], index: 6, kind: input, shape index: {}]
  %s7 = inlined_call_operand.hbm [shape: f32[2,8,32], index: 7, kind: output, shape index: {}]
  %s8 = sld [smem:[#allocation0]]
  $region81: #{tpu_custom_call.1} parent=0
    _
  %s10 = ssub.s32 1, %s8
  %s11 = scalar_select 0, %s10, %s8
  $region1: #{tpu_custom_call.1} parent=0
    #allocation2 [shape = 'u8[4096]{0}', space=vmem, size = 0x1000, scoped, tag = 'input window, operand 0']
    #allocation3 [shape = 's32[2]{0}', space=sflag, size = 0x8, scoped, tag = 'scoped memory for tpu_custom_call.1']
    #allocation4 [shape = 's32[2]{0}', space=sflag, size = 0x8, scoped, tag = 'scoped memory for tpu_custom_call.1']
    #allocation5 [shape = 'u8[4096]{0}', space=vmem, size = 0x1000, scoped, tag = 'input window, operand 1']
    #allocation6 [shape = 's32[2]{0}', space=sflag, size = 0x8, scoped, tag = 'scoped memory for tpu_custom_call.1']
    #allocation7 [shape = 'u8[4096]{0}', space=vmem, size = 0x1000, scoped, tag = 'input window, operand 2']
    #allocation8 [shape = 'u8[24576]{0}', space=vmem, size = 0x6000, scoped, tag = 'input window, operand 3, single buffered']
    #allocation9 [shape = 's32[1]{0}', space=sflag, size = 0x4, scoped, tag = 'scoped memory for tpu_custom_call.1']
    #allocation10 [shape = 'u8[8192]{0}', space=vmem, size = 0x2000, scoped, tag = 'input window, operand 5, single buffered']
    #allocation11 [shape = 'u8[8192]{0}', space=vmem, size = 0x2000, scoped, tag = 'output window, operand 0']
    %12 = vsyncpa [#allocation3], 0
    %s13 = scalar_lea.sflag [#allocation3], 1
    %14 = vsyncpa %s13, 0
    %15 = vsyncpa [#allocation6], 0
    %s16 = scalar_lea.sflag [#allocation6], 1
    %17 = vsyncpa %s16, 0
    %18 = vsyncpa [#allocation9], 0
    %19 = vsyncpa [#allocation4], 0
    %s20 = scalar_lea.sflag [#allocation4], 1
    %21 = vsyncpa %s20, 0
    loop: start=0, step=1, limit=4
    $region2: #{tpu_custom_call.1} parent=1 // loop_pre_header
      _
    $region3: #{tpu_custom_call.1} parent=1 // loop_header
      %s23 = sphi 0, %s27
      %p24 = scmp.ge.s32.totalorder %s23, 4
      %s30 = sphi 0, %s42
      %s31 = sphi 0, %s38
      %s32 = sphi 0, %s30
      %s33 = sphi 0, %s31
      %s34 = sphi 0, %s32
      %s35 = sphi 0, %s33
      %s47 = sphi 0, %s49
      %s50 = sphi 0, %s47
      %s51 = sphi 0, %s50
      %s67 = sphi 0, %s51
      %s73 = sphi 0, %s75
      %s76 = sphi 0, %s73
      %s77 = sphi 0, %s76
      %s93 = sphi 0, %s77
      %s99 = sphi 0, %s101
      %s102 = sphi 0, %s99
      %s103 = sphi 0, %s102
      %s119 = sphi 0, %s103
      %s123 = sphi 0, %s123
      %s125 = sphi 0, %s123
      %s126 = sphi 0, %s125
      %s140 = sphi 0, %s126
      %s144 = sphi 0, %s144
      %s146 = sphi 0, %s144
      %s147 = sphi 0, %s146
      %s161 = sphi 0, %s147
      %s165 = sphi 0, %s165
      %s167 = sphi 0, %s165
      %s168 = sphi 0, %s167
      %s182 = sphi 0, %s168
      %s186 = sphi 0, %s186
      %s188 = sphi 0, %s186
      %s189 = sphi 0, %s188
      %s203 = sphi 0, %s189
      %s211 = sphi 0, %s213
      %s214 = sphi 0, %s211
      %s215 = sphi 0, %s214
      %s231 = sphi 0, %s215
    $region4: #{tpu_custom_call.1} parent=1 // loop_header_branch
      %26 = sbr.rel (%p24) target = $region8
    $region5: #{tpu_custom_call.1} parent=1 // loop_body
      %s28 = ssub.s32 %s23, 1
      %s29 = ssub.s32 %s23, 2
      %s36 = sadd.s32 1, %s31
      %p37 = scmp.ge.s32.totalorder %s36, 1
      %s38 = scalar_select %p37, 0, %s36
      %s39 = sadd.s32 1, %s30
      %s40 = scalar_select %p37, %s39, %s30
      %p41 = scmp.ge.s32.totalorder %s40, 2
      %s42 = scalar_select %p41, 0, %s40
      %s43 = ssub.s32 %s30, %s42
      %s44 = ssub.s32 %s31, %s38
      %s45 = sor.u32 %s43, %s44
      %p46 = scmp.eq.s32.totalorder %s45, 0
      %s48 = sadd.s32 %s47, 1
      %s49 = scalar_select %p46, %s47, %s48
      %p52 = pneg %p46
      %p53 = scmp.eq.s32.totalorder %s23, 1
      %p54 = por %p52, %p53
      %p55 = scmp.ne.s32.totalorder %s47, %s50
      %p56 = scmp.eq.s32.totalorder %s23, 0
      %p57 = por %p55, %p56
      %p58 = scmp.ne.s32.totalorder %s47, %s50
      %p59 = scmp.eq.s32.totalorder %s28, 1
      %p60 = por %p58, %p59
      %p61 = scmp.ne.s32.totalorder %s50, %s51
      %p62 = scmp.eq.s32.totalorder %s28, 0
      %p63 = por %p61, %p62
      %p64 = scmp.ne.s32.totalorder %s50, %s51
      %p65 = scmp.eq.s32.totalorder %s29, 1
      %p66 = por %p64, %p65
      %p68 = scmp.ne.s32.totalorder %s51, %s67
      %p69 = scmp.eq.s32.totalorder %s29, 0
      %p70 = por %p68, %p69
      %s71 = ssub.s32 %s30, %s42
      %p72 = scmp.eq.s32.totalorder %s71, 0
      %s74 = sadd.s32 %s73, 1
      %s75 = scalar_select %p72, %s73, %s74
      %p78 = pneg %p72
      %p79 = scmp.eq.s32.totalorder %s23, 1
      %p80 = por %p78, %p79
      %p81 = scmp.ne.s32.totalorder %s73, %s76
      %p82 = scmp.eq.s32.totalorder %s23, 0
      %p83 = por %p81, %p82
      %p84 = scmp.ne.s32.totalorder %s73, %s76
      %p85 = scmp.eq.s32.totalorder %s28, 1
      %p86 = por %p84, %p85
      %p87 = scmp.ne.s32.totalorder %s76, %s77
      %p88 = scmp.eq.s32.totalorder %s28, 0
      %p89 = por %p87, %p88
      %p90 = scmp.ne.s32.totalorder %s76, %s77
      %p91 = scmp.eq.s32.totalorder %s29, 1
      %p92 = por %p90, %p91
      %p94 = scmp.ne.s32.totalorder %s77, %s93
      %p95 = scmp.eq.s32.totalorder %s29, 0
      %p96 = por %p94, %p95
      %s97 = ssub.s32 %s30, %s42
      %p98 = scmp.eq.s32.totalorder %s97, 0
      %s100 = sadd.s32 %s99, 1
      %s101 = scalar_select %p98, %s99, %s100
      %p104 = pneg %p98
      %p105 = scmp.eq.s32.totalorder %s23, 1
      %p106 = por %p104, %p105
      %p107 = scmp.ne.s32.totalorder %s99, %s102
      %p108 = scmp.eq.s32.totalorder %s23, 0
      %p109 = por %p107, %p108
      %p110 = scmp.ne.s32.totalorder %s99, %s102
      %p111 = scmp.eq.s32.totalorder %s28, 1
      %p112 = por %p110, %p111
      %p113 = scmp.ne.s32.totalorder %s102, %s103
      %p114 = scmp.eq.s32.totalorder %s28, 0
      %p115 = por %p113, %p114
      %p116 = scmp.ne.s32.totalorder %s102, %s103
      %p117 = scmp.eq.s32.totalorder %s29, 1
      %p118 = por %p116, %p117
      %p120 = scmp.ne.s32.totalorder %s103, %s119
      %p121 = scmp.eq.s32.totalorder %s29, 0
      %p122 = por %p120, %p121
      %s124 = sadd.s32 %s123, 1
      %p127 = scmp.eq.s32.totalorder %s23, 1
      %p128 = scmp.ne.s32.totalorder %s123, %s125
      %p129 = scmp.eq.s32.totalorder %s23, 0
      %p130 = por %p128, %p129
      %p131 = scmp.ne.s32.totalorder %s123, %s125
      %p132 = scmp.eq.s32.totalorder %s28, 1
      %p133 = por %p131, %p132
      %p134 = scmp.ne.s32.totalorder %s125, %s126
      %p135 = scmp.eq.s32.totalorder %s28, 0
      %p136 = por %p134, %p135
      %p137 = scmp.ne.s32.totalorder %s125, %s126
      %p138 = scmp.eq.s32.totalorder %s29, 1
      %p139 = por %p137, %p138
      %p141 = scmp.ne.s32.totalorder %s126, %s140
      %p142 = scmp.eq.s32.totalorder %s29, 0
      %p143 = por %p141, %p142
      %s145 = sadd.s32 %s144, 1
      %p148 = scmp.eq.s32.totalorder %s23, 1
      %p149 = scmp.ne.s32.totalorder %s144, %s146
      %p150 = scmp.eq.s32.totalorder %s23, 0
      %p151 = por %p149, %p150
      %p152 = scmp.ne.s32.totalorder %s144, %s146
      %p153 = scmp.eq.s32.totalorder %s28, 1
      %p154 = por %p152, %p153
      %p155 = scmp.ne.s32.totalorder %s146, %s147
      %p156 = scmp.eq.s32.totalorder %s28, 0
      %p157 = por %p155, %p156
      %p158 = scmp.ne.s32.totalorder %s146, %s147
      %p159 = scmp.eq.s32.totalorder %s29, 1
      %p160 = por %p158, %p159
      %p162 = scmp.ne.s32.totalorder %s147, %s161
      %p163 = scmp.eq.s32.totalorder %s29, 0
      %p164 = por %p162, %p163
      %s166 = sadd.s32 %s165, 1
      %p169 = scmp.eq.s32.totalorder %s23, 1
      %p170 = scmp.ne.s32.totalorder %s165, %s167
      %p171 = scmp.eq.s32.totalorder %s23, 0
      %p172 = por %p170, %p171
      %p173 = scmp.ne.s32.totalorder %s165, %s167
      %p174 = scmp.eq.s32.totalorder %s28, 1
      %p175 = por %p173, %p174
      %p176 = scmp.ne.s32.totalorder %s167, %s168
      %p177 = scmp.eq.s32.totalorder %s28, 0
      %p178 = por %p176, %p177
      %p179 = scmp.ne.s32.totalorder %s167, %s168
      %p180 = scmp.eq.s32.totalorder %s29, 1
      %p181 = por %p179, %p180
      %p183 = scmp.ne.s32.totalorder %s168, %s182
      %p184 = scmp.eq.s32.totalorder %s29, 0
      %p185 = por %p183, %p184
      %s187 = sadd.s32 %s186, 1
      %p190 = scmp.eq.s32.totalorder %s23, 1
      %p191 = scmp.ne.s32.totalorder %s186, %s188
      %p192 = scmp.eq.s32.totalorder %s23, 0
      %p193 = por %p191, %p192
      %p194 = scmp.ne.s32.totalorder %s186, %s188
      %p195 = scmp.eq.s32.totalorder %s28, 1
      %p196 = por %p194, %p195
      %p197 = scmp.ne.s32.totalorder %s188, %s189
      %p198 = scmp.eq.s32.totalorder %s28, 0
      %p199 = por %p197, %p198
      %p200 = scmp.ne.s32.totalorder %s188, %s189
      %p201 = scmp.eq.s32.totalorder %s29, 1
      %p202 = por %p200, %p201
      %p204 = scmp.ne.s32.totalorder %s189, %s203
      %p205 = scmp.eq.s32.totalorder %s29, 0
      %p206 = por %p204, %p205
      %s207 = ssub.s32 %s30, %s42
      %s208 = ssub.s32 %s31, %s38
      %s209 = sor.u32 %s207, %s208
      %p210 = scmp.eq.s32.totalorder %s209, 0
      %s212 = sadd.s32 %s211, 1
      %s213 = scalar_select %p210, %s211, %s212
      %p216 = pneg %p210
      %p217 = scmp.eq.s32.totalorder %s23, 1
      %p218 = por %p216, %p217
      %p219 = scmp.ne.s32.totalorder %s211, %s214
      %p220 = scmp.eq.s32.totalorder %s23, 0
      %p221 = por %p219, %p220
      %p222 = scmp.ne.s32.totalorder %s211, %s214
      %p223 = scmp.eq.s32.totalorder %s28, 1
      %p224 = por %p222, %p223
      %p225 = scmp.ne.s32.totalorder %s214, %s215
      %p226 = scmp.eq.s32.totalorder %s28, 0
      %p227 = por %p225, %p226
      %p228 = scmp.ne.s32.totalorder %s214, %s215
      %p229 = scmp.eq.s32.totalorder %s29, 1
      %p230 = por %p228, %p229
      %p232 = scmp.ne.s32.totalorder %s215, %s231
      %p233 = scmp.eq.s32.totalorder %s29, 0
      %p234 = por %p232, %p233
      %p235 = scmp.le.s32.totalorder 1, %s23
      %p236 = scmp.lt.s32.totalorder %s23, 3
      %p237 = pnand %p235, %p236
      %p238 = pneg %p237
      // Predicated region
      $region9: #{tpu_custom_call.1} parent=5 // pred_check
        _
      $region10: #{tpu_custom_call.1} parent=5 // pred_check_branch
        %240 = sbr.rel (%p237) target = $region12
      $region11: #{tpu_custom_call.1} parent=5 // pred_region
        %s241 = ssub.s32 %s23, 1
        // Predicated region
        $region13: #{tpu_custom_call.1} parent=11 // pred_check
          %p242 = pneg %p136
        $region14: #{tpu_custom_call.1} parent=11 // pred_check_branch
          %244 = sbr.rel (%p242) target = $region16
        $region15: #{tpu_custom_call.1} parent=11 // pred_region
          %246 = vsyncadd [#allocation9], 0
          %s247 = sshll.u32 %s3, 4
          %s248 = int_to_ptr.hbm [resolvable:$true] %s247
          %s249 = sshll.u32 [#allocation8], 4
          %s250 = int_to_ptr.vmem [resolvable:$true] %s249
          %255 = dma.hbm_to_vmem [thread:$0]  %s248, 768, %s250, [#allocation9], 64, 64, 4
        $region16: #{tpu_custom_call.1} parent=11 // pred_fallthru
          _
        // Predicated region
        $region17: #{tpu_custom_call.1} parent=11 // pred_check
          %p256 = pneg %p157
        $region18: #{tpu_custom_call.1} parent=11 // pred_check_branch
          %258 = sbr.rel (%p256) target = $region20
        $region19: #{tpu_custom_call.1} parent=11 // pred_region
          _
        $region20: #{tpu_custom_call.1} parent=11 // pred_fallthru
          _
        // Predicated region
        $region21: #{tpu_custom_call.1} parent=11 // pred_check
          %p259 = pneg %p178
        $region22: #{tpu_custom_call.1} parent=11 // pred_check_branch
          %261 = sbr.rel (%p259) target = $region24
        $region23: #{tpu_custom_call.1} parent=11 // pred_region
          %263 = vsyncadd [#allocation9], 0
          %s264 = sshll.u32 %s5, 4
          %s265 = int_to_ptr.hbm [resolvable:$true] %s264
          %s266 = sshll.u32 [#allocation10], 4
          %s267 = int_to_ptr.vmem [resolvable:$true] %s266
          %272 = dma.hbm_to_vmem [thread:$0]  %s265, 256, %s267, [#allocation9], 64, 64, 4
        $region24: #{tpu_custom_call.1} parent=11 // pred_fallthru
          _
        // Predicated region
        $region25: #{tpu_custom_call.1} parent=11 // pred_check
          %p273 = pneg %p199
        $region26: #{tpu_custom_call.1} parent=11 // pred_check_branch
          %275 = sbr.rel (%p273) target = $region28
        $region27: #{tpu_custom_call.1} parent=11 // pred_region
          _
        $region28: #{tpu_custom_call.1} parent=11 // pred_fallthru
          _
      $region12: #{tpu_custom_call.1} parent=5 // pred_fallthru
        _
      %p276 = scmp.lt.s32.totalorder %s23, 2
      // Predicated region
      $region29: #{tpu_custom_call.1} parent=5 // pred_check
        %p277 = pneg %p276
      $region30: #{tpu_custom_call.1} parent=5 // pred_check_branch
        %279 = sbr.rel (%p277) target = $region32
      $region31: #{tpu_custom_call.1} parent=5 // pred_region
        // Predicated region
        $region33: #{tpu_custom_call.1} parent=31 // pred_check
          %p280 = pneg %p57
        $region34: #{tpu_custom_call.1} parent=31 // pred_check_branch
          %282 = sbr.rel (%p280) target = $region36
        $region35: #{tpu_custom_call.1} parent=31 // pred_region
          %s283 = sand.u32 %s47, 1
          %s284 = scalar_lea.sflag [#allocation3], %s283
          %s285 = sand.u32 %s47, 1
          %s286 = smul.addr %s285, 4
          %s287 = scalar_lea.vmem [#allocation2], %s286
          %289 = vsyncadd %s284, 0
          %s290 = sadd.s32 %s31, %s30
          %s291 = smul.addr %s290, 4
          %s292 = scalar_lea.hbm %s0, %s291
          %s294 = sshll.u32 %s292, 4
          %s295 = int_to_ptr.hbm [resolvable:$true] %s294
          %s296 = sshll.u32 %s287, 4
          %s297 = int_to_ptr.vmem [resolvable:$true] %s296
          %299 = dma.hbm_to_vmem [thread:$0]  %s295, 64, %s297, %s284
        $region36: #{tpu_custom_call.1} parent=31 // pred_fallthru
          _
        // Predicated region
        $region37: #{tpu_custom_call.1} parent=31 // pred_check
          %p300 = pneg %p83
        $region38: #{tpu_custom_call.1} parent=31 // pred_check_branch
          %302 = sbr.rel (%p300) target = $region40
        $region39: #{tpu_custom_call.1} parent=31 // pred_region
          %s303 = sand.u32 %s23, 1
          %s304 = scalar_lea.sflag [#allocation6], %s303
          %s305 = sand.u32 %s73, 1
          %s306 = smul.addr %s305, 4
          %s307 = scalar_lea.vmem [#allocation5], %s306
          %309 = vsyncadd %s304, 0
          %s310 = smul.addr %s30, 4
          %s311 = scalar_lea.hbm %s1, %s310
          %s313 = sshll.u32 %s311, 4
          %s314 = int_to_ptr.hbm [resolvable:$true] %s313
          %s315 = sshll.u32 %s307, 4
          %s316 = int_to_ptr.vmem [resolvable:$true] %s315
          %318 = dma.hbm_to_vmem [thread:$0]  %s314, 64, %s316, %s304
        $region40: #{tpu_custom_call.1} parent=31 // pred_fallthru
          _
        // Predicated region
        $region41: #{tpu_custom_call.1} parent=31 // pred_check
          %p319 = pneg %p109
        $region42: #{tpu_custom_call.1} parent=31 // pred_check_branch
          %321 = sbr.rel (%p319) target = $region44
        $region43: #{tpu_custom_call.1} parent=31 // pred_region
          %s322 = sand.u32 %s23, 1
          %s323 = scalar_lea.sflag [#allocation6], %s322
          %s324 = sand.u32 %s99, 1
          %s325 = smul.addr %s324, 4
          %s326 = scalar_lea.vmem [#allocation7], %s325
          %328 = vsyncadd %s323, 0
          %s329 = smul.addr %s30, 4
          %s330 = scalar_lea.hbm %s2, %s329
          %s332 = sshll.u32 %s330, 4
          %s333 = int_to_ptr.hbm [resolvable:$true] %s332
          %s334 = sshll.u32 %s326, 4
          %s335 = int_to_ptr.vmem [resolvable:$true] %s334
          %337 = dma.hbm_to_vmem [thread:$0]  %s333, 64, %s335, %s323
        $region44: #{tpu_custom_call.1} parent=31 // pred_fallthru
          _
      $region32: #{tpu_custom_call.1} parent=5 // pred_fallthru
        _
      %p338 = scmp.le.s32.totalorder 1, %s23
      %p339 = scmp.lt.s32.totalorder %s23, 3
      %p340 = pnand %p338, %p339
      %p341 = pneg %p340
      // Predicated region
      $region45: #{tpu_custom_call.1} parent=5 // pred_check
        _
      $region46: #{tpu_custom_call.1} parent=5 // pred_check_branch
        %343 = sbr.rel (%p340) target = $region48
      $region47: #{tpu_custom_call.1} parent=5 // pred_region
        %s344 = ssub.s32 %s23, 1
        %s345 = sand.u32 %s50, 1
        %s346 = scalar_lea.sflag [#allocation3], %s345
        %s347 = sand.u32 %s50, 1
        %s348 = smul.addr %s347, 4
        %s349 = scalar_lea.vmem [#allocation2], %s348
        // Predicated region
        $region49: #{tpu_custom_call.1} parent=47 // pred_check
          %p350 = pneg %p63
        $region50: #{tpu_custom_call.1} parent=47 // pred_check_branch
          %352 = sbr.rel (%p350) target = $region52
        $region51: #{tpu_custom_call.1} parent=47 // pred_region
          %354 = dma.done %s346, 64
        $region52: #{tpu_custom_call.1} parent=47 // pred_fallthru
          _
        %s355 = sand.u32 %s28, 1
        %s356 = scalar_lea.sflag [#allocation6], %s355
        %s357 = sand.u32 %s76, 1
        %s358 = smul.addr %s357, 4
        %s359 = scalar_lea.vmem [#allocation5], %s358
        // Predicated region
        $region53: #{tpu_custom_call.1} parent=47 // pred_check
          %p360 = pneg %p89
        $region54: #{tpu_custom_call.1} parent=47 // pred_check_branch
          %362 = sbr.rel (%p360) target = $region56
        $region55: #{tpu_custom_call.1} parent=47 // pred_region
          %364 = dma.done %s356, 64
        $region56: #{tpu_custom_call.1} parent=47 // pred_fallthru
          _
        %s365 = sand.u32 %s28, 1
        %s366 = scalar_lea.sflag [#allocation6], %s365
        %s367 = sand.u32 %s102, 1
        %s368 = smul.addr %s367, 4
        %s369 = scalar_lea.vmem [#allocation7], %s368
        // Predicated region
        $region57: #{tpu_custom_call.1} parent=47 // pred_check
          %p370 = pneg %p115
        $region58: #{tpu_custom_call.1} parent=47 // pred_check_branch
          %372 = sbr.rel (%p370) target = $region60
        $region59: #{tpu_custom_call.1} parent=47 // pred_region
          %374 = dma.done %s366, 64
        $region60: #{tpu_custom_call.1} parent=47 // pred_fallthru
          _
        // Predicated region
        $region61: #{tpu_custom_call.1} parent=47 // pred_check
          %p375 = pneg %p136
        $region62: #{tpu_custom_call.1} parent=47 // pred_check_branch
          %377 = sbr.rel (%p375) target = $region64
        $region63: #{tpu_custom_call.1} parent=47 // pred_region
          %379 = dma.done [#allocation9], 768
        $region64: #{tpu_custom_call.1} parent=47 // pred_fallthru
          _
        // Predicated region
        $region65: #{tpu_custom_call.1} parent=47 // pred_check
          %p380 = pneg %p178
        $region66: #{tpu_custom_call.1} parent=47 // pred_check_branch
          %382 = sbr.rel (%p380) target = $region68
        $region67: #{tpu_custom_call.1} parent=47 // pred_region
          %384 = dma.done [#allocation9], 256
        $region68: #{tpu_custom_call.1} parent=47 // pred_fallthru
          _
        %s385 = sand.u32 %s50, 1
        %s386 = scalar_lea.sflag [#allocation3], %s385
        %s387 = sand.u32 %s50, 1
        %s388 = smul.addr %s387, 4
        %s389 = scalar_lea.vmem [#allocation2], %s388
        %p390 = pneg %p63
        %p391 = pneg %p60
        %s392 = sand.u32 %s28, 1
        %s393 = scalar_lea.sflag [#allocation6], %s392
        %s394 = sand.u32 %s76, 1
        %s395 = smul.addr %s394, 4
        %s396 = scalar_lea.vmem [#allocation5], %s395
        %p397 = pneg %p89
        %p398 = pneg %p86
        %s399 = sand.u32 %s28, 1
        %s400 = scalar_lea.sflag [#allocation6], %s399
        %s401 = sand.u32 %s102, 1
        %s402 = smul.addr %s401, 4
        %s403 = scalar_lea.vmem [#allocation7], %s402
        %p404 = pneg %p115
        %p405 = pneg %p112
        %p406 = pneg %p136
        %p407 = pneg %p133
        %p408 = pneg %p157
        %p409 = pneg %p154
        %p410 = pneg %p178
        %p411 = pneg %p175
        %p412 = pneg %p199
        %p413 = pneg %p196
        %p414 = pneg %p227
        %p415 = pneg %p224
        %s416 = sand.u32 %s214, 1
        %s417 = scalar_lea.sflag [#allocation4], %s416
        %s418 = sand.u32 %s214, 1
        %s419 = smul.addr %s418, 8
        %s420 = scalar_lea.vmem [#allocation11], %s419
        %v422 = vld [vmem:[%s349] sm:$0xf]
        %v423 = vld [vmem:[%s359] sm:$0xf]
        %v424 = vld [vmem:[%s369] sm:$0xf]
        %v425 = vld [vmem:[#allocation8] sm:$0xf]
        %v426 = vld [vmem:[#allocation8 + $0x4] sm:$0xf]
        %v427 = vld [vmem:[#allocation8 + $0x8] sm:$0xf]
        %v428 = vld [vmem:[#allocation8 + $0xc] sm:$0xf]
        %v429 = vld [vmem:[%s4] sm:$0x1]
        %v431 = vperm.slane %v429, 0
        %v437 = vunpack.c.l.b16 %v425
        %v438 = vunpack.c.l.b16 %v426
        %v439 = vunpack.c.l.b16 %v427
        %v440 = vunpack.c.l.b16 %v428
        %v441 = vpack.c.b16 %v438, %v437
        %v442 = vpack.c.b16 %v440, %v439
        %vm445 = vcmask 261120
        %v447 = vsel %vm445, %v422, 0
        %449 = vmatpush.bf16.msra.mxu0 0
        %450 = vmatpush.bf16.msra.mxu0 0
        %451 = vmatpush.bf16.msra.mxu0 0
        %452 = vmatpush.bf16.msra.mxu0 0
        %453 = vmatpush.bf16.msra.mxu0 0
        %454 = vmatpush.bf16.msra.mxu0 0
        %455 = vmatpush.bf16.msra.mxu0 %v442
        %456 = vmatpush.bf16.msra.mxu0 %v441
        %457 = vmatmul.bf16.gmra.mxu0 %v447
        %v458 = vpop.f32.mrf.mxu0
        %v459 = vadd.f32 %v431, %v458
        %v460 = vpop.f32.mrf.mxu0
        %461 = vdwg.mxu0
        %s462 = scalar_lea.vmem [#allocation8], 16
        %v463 = vld [vmem:[%s462] sm:$0xf]
        %v464 = vld [vmem:[%s462 + $0x4] sm:$0xf]
        %v465 = vld [vmem:[%s462 + $0x8] sm:$0xf]
        %v466 = vld [vmem:[%s462 + $0xc] sm:$0xf]
        %s467 = scalar_lea.vmem %s4, 1
        %v468 = vld [vmem:[%s467] sm:$0x1]
        %v470 = vperm.slane %v468, 0
        %v476 = vunpack.c.l.b16 %v463
        %v477 = vunpack.c.l.b16 %v464
        %v478 = vunpack.c.l.b16 %v465
        %v479 = vunpack.c.l.b16 %v466
        %v480 = vpack.c.b16 %v477, %v476
        %v481 = vpack.c.b16 %v479, %v478
        %v485 = vsel %vm445, %v423, 0
        %487 = vmatpush.bf16.msra.mxu0 0
        %488 = vmatpush.bf16.msra.mxu0 0
        %489 = vmatpush.bf16.msra.mxu0 0
        %490 = vmatpush.bf16.msra.mxu0 0
        %491 = vmatpush.bf16.msra.mxu0 0
        %492 = vmatpush.bf16.msra.mxu0 0
        %493 = vmatpush.bf16.msra.mxu0 %v481
        %494 = vmatpush.bf16.msra.mxu0 %v480
        %495 = vmatmul.bf16.gmra.mxu0 %v485
        %v496 = vpop.f32.mrf.mxu0
        %v497 = vadd.f32 %v470, %v496
        %v498 = vpop.f32.mrf.mxu0
        %499 = vdwg.mxu0
        %s500 = scalar_lea.vmem [#allocation8], 32
        %v501 = vld [vmem:[%s500] sm:$0xf]
        %v502 = vld [vmem:[%s500 + $0x4] sm:$0xf]
        %v503 = vld [vmem:[%s500 + $0x8] sm:$0xf]
        %v504 = vld [vmem:[%s500 + $0xc] sm:$0xf]
        %s505 = scalar_lea.vmem %s4, 2
        %v506 = vld [vmem:[%s505] sm:$0x1]
        %v508 = vperm.slane %v506, 0
        %v514 = vunpack.c.l.b16 %v501
        %v515 = vunpack.c.l.b16 %v502
        %v516 = vunpack.c.l.b16 %v503
        %v517 = vunpack.c.l.b16 %v504
        %v518 = vpack.c.b16 %v515, %v514
        %v519 = vpack.c.b16 %v517, %v516
        %v523 = vsel %vm445, %v424, 0
        %525 = vmatpush.bf16.msra.mxu0 0
        %526 = vmatpush.bf16.msra.mxu0 0
        %527 = vmatpush.bf16.msra.mxu0 0
        %528 = vmatpush.bf16.msra.mxu0 0
        %529 = vmatpush.bf16.msra.mxu0 0
        %530 = vmatpush.bf16.msra.mxu0 0
        %531 = vmatpush.bf16.msra.mxu0 %v519
        %532 = vmatpush.bf16.msra.mxu0 %v518
        %533 = vmatmul.bf16.gmra.mxu0 %v523
        %v534 = vpop.f32.mrf.mxu0
        %v535 = vadd.f32 %v508, %v534
        %v536 = vpop.f32.mrf.mxu0
        %537 = vdwg.mxu0
        %s538 = smul.u32 %s33, 8
        %v539 = vlaneseq
        %v540 = vshrl.u32 %v539, 7
        %v541 = vstv %s538
        %v542 = vadd.s32 %v541, %v540
        %v543 = vlaneseq
        %v544 = vand.u32 %v543, 127
        %vm545 = vcmp.gt.s32.totalorder %v544, %v542
        %v546 = vsel %vm545, -1e+09, 0.0
        %v547 = vpack.c.bf16 %v459, %v459
        %v548 = vpack.c.bf16 %v497, %v497
        %v549 = vpack.c.bf16 %v535, %v535
        %vm550 = vcmask 64512
        %v552 = vsel %vm550, %v547, 0
        %v555 = vsel %vm550, %v548, 0
        %557 = vmatpush.bf16.xpose.msra.mxu0 0
        %558 = vmatpush.bf16.xpose.msra.mxu0 0
        %559 = vmatpush.bf16.xpose.msra.mxu0 0
        %560 = vmatpush.bf16.xpose.msra.mxu0 0
        %561 = vmatpush.bf16.xpose.msra.mxu0 0
        %562 = vmatpush.bf16.xpose.msra.mxu0 0
        %563 = vmatpush.bf16.xpose.msra.mxu0 0
        %564 = vmatpush.bf16.xpose.msra.mxu0 %v555
        %565 = vmatmul.bf16.gmra.mxu0 %v552
        %v566 = vpop.f32.mrf.mxu0
        %v567 = vadd.f32 %v546, %v566
        %v568 = vpop.f32.mrf.mxu0
        %569 = vdwg.mxu0
        %v570 = vsel %vm550, %v567, -inf
        %571 = vmax.xlane.f32.xlu0 %v570
        %v572 = vpop.xlane.xlu0 %571
        %v573 = vsub.f32 %v567, %v572
        %v574 = vmul.f32 %v573, 1.442695
        %v575 = vpow.pop %v574
        %v576 = vsel %vm550, %v575, 0.0
        %577 = vadd.xlane.f32.xlu0 %v576
        %v578 = vpop.xlane.xlu0 %577
        %v579 = vrcp.pop %v578
        %v580 = vmul.f32 %v575, %v579
        %v581 = vpack.c.bf16 %v580, %v580
        %v583 = vsel %vm550, %v581, 0
        %vm585 = vcmask 1043456
        %v587 = vsel %vm585, %v549, 0
        %589 = vmatpush.bf16.msra.mxu0 0
        %590 = vmatpush.bf16.msra.mxu0 0
        %591 = vmatpush.bf16.msra.mxu0 0
        %592 = vmatpush.bf16.msra.mxu0 0
        %593 = vmatpush.bf16.msra.mxu0 0
        %594 = vmatpush.bf16.msra.mxu0 0
        %595 = vmatpush.bf16.msra.mxu0 0
        %596 = vmatpush.bf16.msra.mxu0 %v587
        %597 = vmatmul.bf16.gmra.mxu0 %v583
        %v598 = vpop.f32.mrf.mxu0
        %v599 = vadd.f32 0.0, %v598
        %v600 = vpop.f32.mrf.mxu0
        %601 = vdwg.mxu0
        %v602 = vpack.c.bf16 %v599, %v599
        %v603 = vld [vmem:[#allocation10] sm:$0xf]
        %605 = vrot.lane.b32.xlu0 %v547, 120
        %v606 = vpop.permute.xlu0 %605
        %608 = vrot.lane.b32.xlu0 %v548, 120
        %v609 = vpop.permute.xlu0 %608
        %v611 = vsel %vm550, %v606, 0
        %v614 = vsel %vm550, %v609, 0
        %616 = vmatpush.bf16.xpose.msra.mxu0 0
        %617 = vmatpush.bf16.xpose.msra.mxu0 0
        %618 = vmatpush.bf16.xpose.msra.mxu0 0
        %619 = vmatpush.bf16.xpose.msra.mxu0 0
        %620 = vmatpush.bf16.xpose.msra.mxu0 0
        %621 = vmatpush.bf16.xpose.msra.mxu0 0
        %622 = vmatpush.bf16.xpose.msra.mxu0 0
        %623 = vmatpush.bf16.xpose.msra.mxu0 %v614
        %624 = vmatmul.bf16.gmra.mxu0 %v611
        %v625 = vpop.f32.mrf.mxu0
        %v626 = vadd.f32 %v546, %v625
        %v627 = vpop.f32.mrf.mxu0
        %628 = vdwg.mxu0
        %v629 = vsel %vm550, %v626, -inf
        %630 = vmax.xlane.f32.xlu0 %v629
        %v631 = vpop.xlane.xlu0 %630
        %v632 = vsub.f32 %v626, %v631
        %v633 = vmul.f32 %v632, 1.442695
        %v634 = vpow.pop %v633
        %v635 = vsel %vm550, %v634, 0.0
        %636 = vadd.xlane.f32.xlu0 %v635
        %v637 = vpop.xlane.xlu0 %636
        %v638 = vrcp.pop %v637
        %v639 = vmul.f32 %v634, %v638
        %v640 = vpack.c.bf16 %v639, %v639
        %642 = vrot.lane.b32.xlu0 %v549, 120
        %v643 = vpop.permute.xlu0 %642
        %v645 = vsel %vm550, %v640, 0
        %v648 = vsel %vm585, %v643, 0
        %650 = vmatpush.bf16.msra.mxu0 0
        %651 = vmatpush.bf16.msra.mxu0 0
        %652 = vmatpush.bf16.msra.mxu0 0
        %653 = vmatpush.bf16.msra.mxu0 0
        %654 = vmatpush.bf16.msra.mxu0 0
        %655 = vmatpush.bf16.msra.mxu0 0
        %656 = vmatpush.bf16.msra.mxu0 0
        %657 = vmatpush.bf16.msra.mxu0 %v648
        %658 = vmatmul.bf16.gmra.mxu0 %v645
        %v659 = vpop.f32.mrf.mxu0
        %v660 = vadd.f32 0.0, %v659
        %v661 = vpop.f32.mrf.mxu0
        %662 = vdwg.mxu0
        %v663 = vpack.c.bf16 %v660, %v660
        %v664 = vld [vmem:[#allocation10 + $0x4] sm:$0xf]
        %v666 = vsel %vm550, %v663, 0
        %v669 = vsel %vm585, %v664, 0
        %671 = vmatpush.bf16.msra.mxu0 0
        %672 = vmatpush.bf16.msra.mxu0 0
        %673 = vmatpush.bf16.msra.mxu0 0
        %674 = vmatpush.bf16.msra.mxu0 0
        %675 = vmatpush.bf16.msra.mxu0 0
        %676 = vmatpush.bf16.msra.mxu0 0
        %677 = vmatpush.bf16.msra.mxu0 0
        %678 = vmatpush.bf16.msra.mxu0 %v669
        %679 = vmatmul.bf16.gmra.mxu0 %v666
        %v680 = vpop.f32.mrf.mxu0
        %v681 = vadd.f32 0.0, %v680
        %v682 = vpop.f32.mrf.mxu0
        %683 = vdwg.mxu0
        %v685 = vsel %vm550, %v602, 0
        %v688 = vsel %vm585, %v603, 0
        %690 = vmatpush.bf16.msra.mxu0 0
        %691 = vmatpush.bf16.msra.mxu0 0
        %692 = vmatpush.bf16.msra.mxu0 0
        %693 = vmatpush.bf16.msra.mxu0 0
        %694 = vmatpush.bf16.msra.mxu0 0
        %695 = vmatpush.bf16.msra.mxu0 0
        %696 = vmatpush.bf16.msra.mxu0 0
        %697 = vmatpush.bf16.msra.mxu0 %v688
        %698 = vmatmul.bf16.gmra.mxu0 %v685
        %v699 = vpop.f32.mrf.mxu0
        %v700 = vadd.f32 %v681, %v699
        %v701 = vpop.f32.mrf.mxu0
        %702 = vdwg.mxu0
        %703 = vrot.lane.b32.xlu0 %v547, 112
        %v704 = vpop.permute.xlu0 %703
        %705 = vrot.lane.b32.xlu0 %v548, 112
        %v706 = vpop.permute.xlu0 %705
        %v708 = vsel %vm550, %v704, 0
        %v711 = vsel %vm550, %v706, 0
        %713 = vmatpush.bf16.xpose.msra.mxu0 0
        %714 = vmatpush.bf16.xpose.msra.mxu0 0
        %715 = vmatpush.bf16.xpose.msra.mxu0 0
        %716 = vmatpush.bf16.xpose.msra.mxu0 0
        %717 = vmatpush.bf16.xpose.msra.mxu0 0
        %718 = vmatpush.bf16.xpose.msra.mxu0 0
        %719 = vmatpush.bf16.xpose.msra.mxu0 0
        %720 = vmatpush.bf16.xpose.msra.mxu0 %v711
        %721 = vmatmul.bf16.gmra.mxu0 %v708
        %v722 = vpop.f32.mrf.mxu0
        %v723 = vadd.f32 %v546, %v722
        %v724 = vpop.f32.mrf.mxu0
        %725 = vdwg.mxu0
        %v726 = vsel %vm550, %v723, -inf
        %727 = vmax.xlane.f32.xlu0 %v726
        %v728 = vpop.xlane.xlu0 %727
        %v729 = vsub.f32 %v723, %v728
        %v730 = vmul.f32 %v729, 1.442695
        %v731 = vpow.pop %v730
        %v732 = vsel %vm550, %v731, 0.0
        %733 = vadd.xlane.f32.xlu0 %v732
        %v734 = vpop.xlane.xlu0 %733
        %v735 = vrcp.pop %v734
        %v736 = vmul.f32 %v731, %v735
        %v737 = vpack.c.bf16 %v736, %v736
        %738 = vrot.lane.b32.xlu0 %v549, 112
        %v739 = vpop.permute.xlu0 %738
        %v741 = vsel %vm550, %v737, 0
        %v744 = vsel %vm585, %v739, 0
        %746 = vmatpush.bf16.msra.mxu0 0
        %747 = vmatpush.bf16.msra.mxu0 0
        %748 = vmatpush.bf16.msra.mxu0 0
        %749 = vmatpush.bf16.msra.mxu0 0
        %750 = vmatpush.bf16.msra.mxu0 0
        %751 = vmatpush.bf16.msra.mxu0 0
        %752 = vmatpush.bf16.msra.mxu0 0
        %753 = vmatpush.bf16.msra.mxu0 %v744
        %754 = vmatmul.bf16.gmra.mxu0 %v741
        %v755 = vpop.f32.mrf.mxu0
        %v756 = vadd.f32 0.0, %v755
        %v757 = vpop.f32.mrf.mxu0
        %758 = vdwg.mxu0
        %v759 = vpack.c.bf16 %v756, %v756
        %v760 = vld [vmem:[#allocation10 + $0x8] sm:$0xf]
        %v762 = vsel %vm550, %v759, 0
        %v765 = vsel %vm585, %v760, 0
        %767 = vmatpush.bf16.msra.mxu0 0
        %768 = vmatpush.bf16.msra.mxu0 0
        %769 = vmatpush.bf16.msra.mxu0 0
        %770 = vmatpush.bf16.msra.mxu0 0
        %771 = vmatpush.bf16.msra.mxu0 0
        %772 = vmatpush.bf16.msra.mxu0 0
        %773 = vmatpush.bf16.msra.mxu0 0
        %774 = vmatpush.bf16.msra.mxu0 %v765
        %775 = vmatmul.bf16.gmra.mxu0 %v762
        %v776 = vpop.f32.mrf.mxu0
        %v777 = vadd.f32 0.0, %v776
        %v778 = vpop.f32.mrf.mxu0
        %779 = vdwg.mxu0
        %v780 = vadd.f32 %v700, %v777
        %781 = vrot.lane.b32.xlu0 %v547, 104
        %v782 = vpop.permute.xlu0 %781
        %783 = vrot.lane.b32.xlu0 %v548, 104
        %v784 = vpop.permute.xlu0 %783
        %v786 = vsel %vm550, %v782, 0
        %v789 = vsel %vm550, %v784, 0
        %791 = vmatpush.bf16.xpose.msra.mxu0 0
        %792 = vmatpush.bf16.xpose.msra.mxu0 0
        %793 = vmatpush.bf16.xpose.msra.mxu0 0
        %794 = vmatpush.bf16.xpose.msra.mxu0 0
        %795 = vmatpush.bf16.xpose.msra.mxu0 0
        %796 = vmatpush.bf16.xpose.msra.mxu0 0
        %797 = vmatpush.bf16.xpose.msra.mxu0 0
        %798 = vmatpush.bf16.xpose.msra.mxu0 %v789
        %799 = vmatmul.bf16.gmra.mxu0 %v786
        %v800 = vpop.f32.mrf.mxu0
        %v801 = vadd.f32 %v546, %v800
        %v802 = vpop.f32.mrf.mxu0
        %803 = vdwg.mxu0
        %v804 = vsel %vm550, %v801, -inf
        %805 = vmax.xlane.f32.xlu0 %v804
        %v806 = vpop.xlane.xlu0 %805
        %v807 = vsub.f32 %v801, %v806
        %v808 = vmul.f32 %v807, 1.442695
        %v809 = vpow.pop %v808
        %v810 = vsel %vm550, %v809, 0.0
        %811 = vadd.xlane.f32.xlu0 %v810
        %v812 = vpop.xlane.xlu0 %811
        %v813 = vrcp.pop %v812
        %v814 = vmul.f32 %v809, %v813
        %v815 = vpack.c.bf16 %v814, %v814
        %816 = vrot.lane.b32.xlu0 %v549, 104
        %v817 = vpop.permute.xlu0 %816
        %v819 = vsel %vm550, %v815, 0
        %v822 = vsel %vm585, %v817, 0
        %824 = vmatpush.bf16.msra.mxu0 0
        %825 = vmatpush.bf16.msra.mxu0 0
        %826 = vmatpush.bf16.msra.mxu0 0
        %827 = vmatpush.bf16.msra.mxu0 0
        %828 = vmatpush.bf16.msra.mxu0 0
        %829 = vmatpush.bf16.msra.mxu0 0
        %830 = vmatpush.bf16.msra.mxu0 0
        %831 = vmatpush.bf16.msra.mxu0 %v822
        %832 = vmatmul.bf16.gmra.mxu0 %v819
        %v833 = vpop.f32.mrf.mxu0
        %v834 = vadd.f32 0.0, %v833
        %v835 = vpop.f32.mrf.mxu0
        %836 = vdwg.mxu0
        %v837 = vpack.c.bf16 %v834, %v834
        %v838 = vld [vmem:[#allocation10 + $0xc] sm:$0xf]
        %v840 = vsel %vm550, %v837, 0
        %v843 = vsel %vm585, %v838, 0
        %845 = vmatpush.bf16.msra.mxu0 0
        %846 = vmatpush.bf16.msra.mxu0 0
        %847 = vmatpush.bf16.msra.mxu0 0
        %848 = vmatpush.bf16.msra.mxu0 0
        %849 = vmatpush.bf16.msra.mxu0 0
        %850 = vmatpush.bf16.msra.mxu0 0
        %851 = vmatpush.bf16.msra.mxu0 0
        %852 = vmatpush.bf16.msra.mxu0 %v843
        %853 = vmatmul.bf16.gmra.mxu0 %v840
        %v854 = vpop.f32.mrf.mxu0
        %v855 = vadd.f32 0.0, %v854
        %v856 = vpop.f32.mrf.mxu0
        %857 = vdwg.mxu0
        %v858 = vadd.f32 %v780, %v855
        %v859 = vld [vmem:[%s6] sm:$0x1]
        %v861 = vperm.slane %v859, 0
        %v863 = vadd.f32 %v858, %v861
        %864 = vst.msk [vmem:[%s420] sm:$0xff] %vm445, %v863
        %s865 = sand.u32 %s214, 1
        %s866 = scalar_lea.sflag [#allocation4], %s865
        %s867 = sand.u32 %s214, 1
        %s868 = smul.addr %s867, 8
        %s869 = scalar_lea.vmem [#allocation11], %s868
        // Predicated region
        $region69: #{tpu_custom_call.1} parent=47 // pred_check
          %p870 = pneg %p224
        $region70: #{tpu_custom_call.1} parent=47 // pred_check_branch
          %872 = sbr.rel (%p870) target = $region72
        $region71: #{tpu_custom_call.1} parent=47 // pred_region
          %874 = vsyncadd %s866, 0
          %s875 = sadd.s32 %s33, %s32
          %s876 = smul.addr %s875, 8
          %s877 = scalar_lea.hbm %s7, %s876
          %s879 = sshll.u32 %s869, 4
          %s880 = int_to_ptr.vmem [resolvable:$true] %s879
          %s881 = sshll.u32 %s877, 4
          %s882 = int_to_ptr.hbm [resolvable:$true] %s881
          %884 = dma.vmem_to_hbm [thread:$0]  %s880, 128, %s882, %s866
        $region72: #{tpu_custom_call.1} parent=47 // pred_fallthru
          _
      $region48: #{tpu_custom_call.1} parent=5 // pred_fallthru
        _
      %p885 = scmp.le.s32.totalorder 2, %s23
      // Predicated region
      $region73: #{tpu_custom_call.1} parent=5 // pred_check
        %p886 = pneg %p885
      $region74: #{tpu_custom_call.1} parent=5 // pred_check_branch
        %888 = sbr.rel (%p886) target = $region76
      $region75: #{tpu_custom_call.1} parent=5 // pred_region
        %s889 = ssub.s32 %s23, 2
        // Predicated region
        $region77: #{tpu_custom_call.1} parent=75 // pred_check
          %p890 = pneg %p230
        $region78: #{tpu_custom_call.1} parent=75 // pred_check_branch
          %892 = sbr.rel (%p890) target = $region80
        $region79: #{tpu_custom_call.1} parent=75 // pred_region
          %s893 = sand.u32 %s215, 1
          %s894 = scalar_lea.sflag [#allocation4], %s893
          %s895 = sand.u32 %s215, 1
          %s896 = smul.addr %s895, 8
          %s897 = scalar_lea.vmem [#allocation11], %s896
          %899 = dma.done %s894, 128
        $region80: #{tpu_custom_call.1} parent=75 // pred_fallthru
          _
      $region76: #{tpu_custom_call.1} parent=5 // pred_fallthru
        _
    $region6: #{tpu_custom_call.1} parent=1 // loop_footer
      %s27 = sadd.s32 1, %s23
    $region7: #{tpu_custom_call.1} parent=1 // loop_footer_branch
      %22 = sbr.rel target = $region3
    $region8: #{tpu_custom_call.1} parent=1 // loop_exit
      _
    %900 = vsyncpa [#allocation3], 1
    %s901 = scalar_lea.sflag [#allocation3], 1
    %902 = vsyncpa %s901, 1
    %903 = vsyncpa [#allocation6], 1
    %s904 = scalar_lea.sflag [#allocation6], 1
    %905 = vsyncpa %s904, 1
    %906 = vsyncpa [#allocation9], 1
    %907 = vsyncpa [#allocation4], 1
    %s908 = scalar_lea.sflag [#allocation4], 1
    %909 = vsyncpa %s908, 1

// kernel: tpu_custom_call.1
$region0: #{tpu_custom_call.1}
  #allocation0 [shape = 'u32[]', space=smem, size = 0x4, offset = 0x4, fixed_abs, tag = 'smem constant byte address 0x4 - core index']
  #allocation1 [shape = 'u32[72,128]{1,0:T(1,128)}', space=vmem, size = 0x9000, scoped, tag = 'internal scratch']
  %s0 = inlined_call_operand.hbm [shape: bf16[2,8,32], index: 0, kind: input, shape index: {}]
  %s1 = inlined_call_operand.hbm [shape: bf16[2,8,32], index: 1, kind: input, shape index: {}]
  %s2 = inlined_call_operand.hbm [shape: bf16[2,8,32], index: 2, kind: input, shape index: {}]
  %s3 = inlined_call_operand.hbm [shape: bf16[3,32,32], index: 3, kind: input, shape index: {}]
  %s4 = inlined_call_operand.vmem [shape: f32[3,1,32], index: 4, kind: input, shape index: {}]
  %s5 = inlined_call_operand.hbm [shape: bf16[32,32], index: 5, kind: input, shape index: {}]
  %s6 = inlined_call_operand.vmem [shape: f32[1,32], index: 6, kind: input, shape index: {}]
  %s7 = inlined_call_operand.hbm [shape: f32[2,8,32], index: 7, kind: output, shape index: {}]
  %s8 = sld [smem:[#allocation0]]
  $region81: #{tpu_custom_call.1} parent=0
    _
  %s10 = ssub.s32 1, %s8
  %s11 = scalar_select 0, %s10, %s8
  $region1: #{tpu_custom_call.1} parent=0
    #allocation2 [shape = 'u8[4096]{0}', space=vmem, size = 0x1000, scoped, tag = 'input window, operand 0']
    #allocation3 [shape = 's32[2]{0}', space=sflag, size = 0x8, scoped, tag = 'scoped memory for tpu_custom_call.1']
    #allocation4 [shape = 's32[2]{0}', space=sflag, size = 0x8, scoped, tag = 'scoped memory for tpu_custom_call.1']
    #allocation5 [shape = 'u8[4096]{0}', space=vmem, size = 0x1000, scoped, tag = 'input window, operand 1']
    #allocation6 [shape = 's32[2]{0}', space=sflag, size = 0x8, scoped, tag = 'scoped memory for tpu_custom_call.1']
    #allocation7 [shape = 'u8[4096]{0}', space=vmem, size = 0x1000, scoped, tag = 'input window, operand 2']
    #allocation8 [shape = 'u8[24576]{0}', space=vmem, size = 0x6000, scoped, tag = 'input window, operand 3, single buffered']
    #allocation9 [shape = 's32[1]{0}', space=sflag, size = 0x4, scoped, tag = 'scoped memory for tpu_custom_call.1']
    #allocation10 [shape = 'u8[8192]{0}', space=vmem, size = 0x2000, scoped, tag = 'input window, operand 5, single buffered']
    #allocation11 [shape = 'u8[8192]{0}', space=vmem, size = 0x2000, scoped, tag = 'output window, operand 0']
    %12 = vsyncpa [#allocation3], 0
    %s13 = scalar_lea.sflag [#allocation3], 1
    %14 = vsyncpa %s13, 0
    %15 = vsyncpa [#allocation6], 0
    %s16 = scalar_lea.sflag [#allocation6], 1
    %17 = vsyncpa %s16, 0
    %18 = vsyncpa [#allocation9], 0
    %19 = vsyncpa [#allocation4], 0
    %s20 = scalar_lea.sflag [#allocation4], 1
    %21 = vsyncpa %s20, 0
    loop: start=0, step=1, limit=4
    $region2: #{tpu_custom_call.1} parent=1 // loop_pre_header
      _
    $region3: #{tpu_custom_call.1} parent=1 // loop_header
      %s23 = sphi 0, %s27
      %p24 = scmp.ge.s32.totalorder %s23, 4
      %s30 = sphi 0, %s42
      %s31 = sphi 0, %s38
      %s32 = sphi 0, %s30
      %s33 = sphi 0, %s31
      %s34 = sphi 0, %s32
      %s35 = sphi 0, %s33
      %s47 = sphi 0, %s49
      %s50 = sphi 0, %s47
      %s51 = sphi 0, %s50
      %s67 = sphi 0, %s51
      %s73 = sphi 0, %s75
      %s76 = sphi 0, %s73
      %s77 = sphi 0, %s76
      %s93 = sphi 0, %s77
      %s99 = sphi 0, %s101
      %s102 = sphi 0, %s99
      %s103 = sphi 0, %s102
      %s119 = sphi 0, %s103
      %s123 = sphi 0, %s123
      %s125 = sphi 0, %s123
      %s126 = sphi 0, %s125
      %s140 = sphi 0, %s126
      %s144 = sphi 0, %s144
      %s146 = sphi 0, %s144
      %s147 = sphi 0, %s146
      %s161 = sphi 0, %s147
      %s165 = sphi 0, %s165
      %s167 = sphi 0, %s165
      %s168 = sphi 0, %s167
      %s182 = sphi 0, %s168
      %s186 = sphi 0, %s186
      %s188 = sphi 0, %s186
      %s189 = sphi 0, %s188
      %s203 = sphi 0, %s189
      %s211 = sphi 0, %s213
      %s214 = sphi 0, %s211
      %s215 = sphi 0, %s214
      %s231 = sphi 0, %s215
    $region4: #{tpu_custom_call.1} parent=1 // loop_header_branch
      %26 = sbr.rel (%p24) target = $region8
    $region5: #{tpu_custom_call.1} parent=1 // loop_body
      %s28 = ssub.s32 %s23, 1
      %s29 = ssub.s32 %s23, 2
      %s36 = sadd.s32 1, %s31
      %p37 = scmp.ge.s32.totalorder %s36, 1
      %s38 = scalar_select %p37, 0, %s36
      %s39 = sadd.s32 1, %s30
      %s40 = scalar_select %p37, %s39, %s30
      %p41 = scmp.ge.s32.totalorder %s40, 2
      %s42 = scalar_select %p41, 0, %s40
      %s43 = ssub.s32 %s30, %s42
      %s44 = ssub.s32 %s31, %s38
      %s45 = sor.u32 %s43, %s44
      %p46 = scmp.eq.s32.totalorder %s45, 0
      %s48 = sadd.s32 %s47, 1
      %s49 = scalar_select %p46, %s47, %s48
      %p52 = pneg %p46
      %p53 = scmp.eq.s32.totalorder %s23, 1
      %p54 = por %p52, %p53
      %p55 = scmp.ne.s32.totalorder %s47, %s50
      %p56 = scmp.eq.s32.totalorder %s23, 0
      %p57 = por %p55, %p56
      %p58 = scmp.ne.s32.totalorder %s47, %s50
      %p59 = scmp.eq.s32.totalorder %s28, 1
      %p60 = por %p58, %p59
      %p61 = scmp.ne.s32.totalorder %s50, %s51
      %p62 = scmp.eq.s32.totalorder %s28, 0
      %p63 = por %p61, %p62
      %p64 = scmp.ne.s32.totalorder %s50, %s51
      %p65 = scmp.eq.s32.totalorder %s29, 1
      %p66 = por %p64, %p65
      %p68 = scmp.ne.s32.totalorder %s51, %s67
      %p69 = scmp.eq.s32.totalorder %s29, 0
      %p70 = por %p68, %p69
      %s71 = ssub.s32 %s30, %s42
      %p72 = scmp.eq.s32.totalorder %s71, 0
      %s74 = sadd.s32 %s73, 1
      %s75 = scalar_select %p72, %s73, %s74
      %p78 = pneg %p72
      %p79 = scmp.eq.s32.totalorder %s23, 1
      %p80 = por %p78, %p79
      %p81 = scmp.ne.s32.totalorder %s73, %s76
      %p82 = scmp.eq.s32.totalorder %s23, 0
      %p83 = por %p81, %p82
      %p84 = scmp.ne.s32.totalorder %s73, %s76
      %p85 = scmp.eq.s32.totalorder %s28, 1
      %p86 = por %p84, %p85
      %p87 = scmp.ne.s32.totalorder %s76, %s77
      %p88 = scmp.eq.s32.totalorder %s28, 0
      %p89 = por %p87, %p88
      %p90 = scmp.ne.s32.totalorder %s76, %s77
      %p91 = scmp.eq.s32.totalorder %s29, 1
      %p92 = por %p90, %p91
      %p94 = scmp.ne.s32.totalorder %s77, %s93
      %p95 = scmp.eq.s32.totalorder %s29, 0
      %p96 = por %p94, %p95
      %s97 = ssub.s32 %s30, %s42
      %p98 = scmp.eq.s32.totalorder %s97, 0
      %s100 = sadd.s32 %s99, 1
      %s101 = scalar_select %p98, %s99, %s100
      %p104 = pneg %p98
      %p105 = scmp.eq.s32.totalorder %s23, 1
      %p106 = por %p104, %p105
      %p107 = scmp.ne.s32.totalorder %s99, %s102
      %p108 = scmp.eq.s32.totalorder %s23, 0
      %p109 = por %p107, %p108
      %p110 = scmp.ne.s32.totalorder %s99, %s102
      %p111 = scmp.eq.s32.totalorder %s28, 1
      %p112 = por %p110, %p111
      %p113 = scmp.ne.s32.totalorder %s102, %s103
      %p114 = scmp.eq.s32.totalorder %s28, 0
      %p115 = por %p113, %p114
      %p116 = scmp.ne.s32.totalorder %s102, %s103
      %p117 = scmp.eq.s32.totalorder %s29, 1
      %p118 = por %p116, %p117
      %p120 = scmp.ne.s32.totalorder %s103, %s119
      %p121 = scmp.eq.s32.totalorder %s29, 0
      %p122 = por %p120, %p121
      %s124 = sadd.s32 %s123, 1
      %p127 = scmp.eq.s32.totalorder %s23, 1
      %p128 = scmp.ne.s32.totalorder %s123, %s125
      %p129 = scmp.eq.s32.totalorder %s23, 0
      %p130 = por %p128, %p129
      %p131 = scmp.ne.s32.totalorder %s123, %s125
      %p132 = scmp.eq.s32.totalorder %s28, 1
      %p133 = por %p131, %p132
      %p134 = scmp.ne.s32.totalorder %s125, %s126
      %p135 = scmp.eq.s32.totalorder %s28, 0
      %p136 = por %p134, %p135
      %p137 = scmp.ne.s32.totalorder %s125, %s126
      %p138 = scmp.eq.s32.totalorder %s29, 1
      %p139 = por %p137, %p138
      %p141 = scmp.ne.s32.totalorder %s126, %s140
      %p142 = scmp.eq.s32.totalorder %s29, 0
      %p143 = por %p141, %p142
      %s145 = sadd.s32 %s144, 1
      %p148 = scmp.eq.s32.totalorder %s23, 1
      %p149 = scmp.ne.s32.totalorder %s144, %s146
      %p150 = scmp.eq.s32.totalorder %s23, 0
      %p151 = por %p149, %p150
      %p152 = scmp.ne.s32.totalorder %s144, %s146
      %p153 = scmp.eq.s32.totalorder %s28, 1
      %p154 = por %p152, %p153
      %p155 = scmp.ne.s32.totalorder %s146, %s147
      %p156 = scmp.eq.s32.totalorder %s28, 0
      %p157 = por %p155, %p156
      %p158 = scmp.ne.s32.totalorder %s146, %s147
      %p159 = scmp.eq.s32.totalorder %s29, 1
      %p160 = por %p158, %p159
      %p162 = scmp.ne.s32.totalorder %s147, %s161
      %p163 = scmp.eq.s32.totalorder %s29, 0
      %p164 = por %p162, %p163
      %s166 = sadd.s32 %s165, 1
      %p169 = scmp.eq.s32.totalorder %s23, 1
      %p170 = scmp.ne.s32.totalorder %s165, %s167
      %p171 = scmp.eq.s32.totalorder %s23, 0
      %p172 = por %p170, %p171
      %p173 = scmp.ne.s32.totalorder %s165, %s167
      %p174 = scmp.eq.s32.totalorder %s28, 1
      %p175 = por %p173, %p174
      %p176 = scmp.ne.s32.totalorder %s167, %s168
      %p177 = scmp.eq.s32.totalorder %s28, 0
      %p178 = por %p176, %p177
      %p179 = scmp.ne.s32.totalorder %s167, %s168
      %p180 = scmp.eq.s32.totalorder %s29, 1
      %p181 = por %p179, %p180
      %p183 = scmp.ne.s32.totalorder %s168, %s182
      %p184 = scmp.eq.s32.totalorder %s29, 0
      %p185 = por %p183, %p184
      %s187 = sadd.s32 %s186, 1
      %p190 = scmp.eq.s32.totalorder %s23, 1
      %p191 = scmp.ne.s32.totalorder %s186, %s188
      %p192 = scmp.eq.s32.totalorder %s23, 0
      %p193 = por %p191, %p192
      %p194 = scmp.ne.s32.totalorder %s186, %s188
      %p195 = scmp.eq.s32.totalorder %s28, 1
      %p196 = por %p194, %p195
      %p197 = scmp.ne.s32.totalorder %s188, %s189
      %p198 = scmp.eq.s32.totalorder %s28, 0
      %p199 = por %p197, %p198
      %p200 = scmp.ne.s32.totalorder %s188, %s189
      %p201 = scmp.eq.s32.totalorder %s29, 1
      %p202 = por %p200, %p201
      %p204 = scmp.ne.s32.totalorder %s189, %s203
      %p205 = scmp.eq.s32.totalorder %s29, 0
      %p206 = por %p204, %p205
      %s207 = ssub.s32 %s30, %s42
      %s208 = ssub.s32 %s31, %s38
      %s209 = sor.u32 %s207, %s208
      %p210 = scmp.eq.s32.totalorder %s209, 0
      %s212 = sadd.s32 %s211, 1
      %s213 = scalar_select %p210, %s211, %s212
      %p216 = pneg %p210
      %p217 = scmp.eq.s32.totalorder %s23, 1
      %p218 = por %p216, %p217
      %p219 = scmp.ne.s32.totalorder %s211, %s214
      %p220 = scmp.eq.s32.totalorder %s23, 0
      %p221 = por %p219, %p220
      %p222 = scmp.ne.s32.totalorder %s211, %s214
      %p223 = scmp.eq.s32.totalorder %s28, 1
      %p224 = por %p222, %p223
      %p225 = scmp.ne.s32.totalorder %s214, %s215
      %p226 = scmp.eq.s32.totalorder %s28, 0
      %p227 = por %p225, %p226
      %p228 = scmp.ne.s32.totalorder %s214, %s215
      %p229 = scmp.eq.s32.totalorder %s29, 1
      %p230 = por %p228, %p229
      %p232 = scmp.ne.s32.totalorder %s215, %s231
      %p233 = scmp.eq.s32.totalorder %s29, 0
      %p234 = por %p232, %p233
      %p235 = scmp.le.s32.totalorder 1, %s23
      %p236 = scmp.lt.s32.totalorder %s23, 3
      %p237 = pnand %p235, %p236
      %p238 = pneg %p237
      // Predicated region
      $region9: #{tpu_custom_call.1} parent=5 // pred_check
        _
      $region10: #{tpu_custom_call.1} parent=5 // pred_check_branch
        %240 = sbr.rel (%p237) target = $region12
      $region11: #{tpu_custom_call.1} parent=5 // pred_region
        %s241 = ssub.s32 %s23, 1
        // Predicated region
        $region13: #{tpu_custom_call.1} parent=11 // pred_check
          %p242 = pneg %p136
        $region14: #{tpu_custom_call.1} parent=11 // pred_check_branch
          %244 = sbr.rel (%p242) target = $region16
        $region15: #{tpu_custom_call.1} parent=11 // pred_region
          %246 = vsyncadd [#allocation9], 0
          %s247 = sshll.u32 %s3, 4
          %s248 = int_to_ptr.hbm [resolvable:$true] %s247
          %s249 = sshll.u32 [#allocation8], 4
          %s250 = int_to_ptr.vmem [resolvable:$true] %s249
          %255 = dma.hbm_to_vmem [thread:$0]  %s248, 768, %s250, [#allocation9], 64, 64, 4
        $region16: #{tpu_custom_call.1} parent=11 // pred_fallthru
          _
        // Predicated region
        $region17: #{tpu_custom_call.1} parent=11 // pred_check
          %p256 = pneg %p157
        $region18: #{tpu_custom_call.1} parent=11 // pred_check_branch
          %258 = sbr.rel (%p256) target = $region20
        $region19: #{tpu_custom_call.1} parent=11 // pred_region
          _
        $region20: #{tpu_custom_call.1} parent=11 // pred_fallthru
          _
        // Predicated region
        $region21: #{tpu_custom_call.1} parent=11 // pred_check
          %p259 = pneg %p178
        $region22: #{tpu_custom_call.1} parent=11 // pred_check_branch
          %261 = sbr.rel (%p259) target = $region24
        $region23: #{tpu_custom_call.1} parent=11 // pred_region
          %263 = vsyncadd [#allocation9], 0
          %s264 = sshll.u32 %s5, 4
          %s265 = int_to_ptr.hbm [resolvable:$true] %s264
          %s266 = sshll.u32 [#allocation10], 4
          %s267 = int_to_ptr.vmem [resolvable:$true] %s266
          %272 = dma.hbm_to_vmem [thread:$0]  %s265, 256, %s267, [#allocation9], 64, 64, 4
        $region24: #{tpu_custom_call.1} parent=11 // pred_fallthru
          _
        // Predicated region
        $region25: #{tpu_custom_call.1} parent=11 // pred_check
          %p273 = pneg %p199
        $region26: #{tpu_custom_call.1} parent=11 // pred_check_branch
          %275 = sbr.rel (%p273) target = $region28
        $region27: #{tpu_custom_call.1} parent=11 // pred_region
          _
        $region28: #{tpu_custom_call.1} parent=11 // pred_fallthru
          _
      $region12: #{tpu_custom_call.1} parent=5 // pred_fallthru
        _
      %p276 = scmp.lt.s32.totalorder %s23, 2
      // Predicated region
      $region29: #{tpu_custom_call.1} parent=5 // pred_check
        %p277 = pneg %p276
      $region30: #{tpu_custom_call.1} parent=5 // pred_check_branch
        %279 = sbr.rel (%p277) target = $region32
      $region31: #{tpu_custom_call.1} parent=5 // pred_region
        // Predicated region
        $region33: #{tpu_custom_call.1} parent=31 // pred_check
          %p280 = pneg %p57
        $region34: #{tpu_custom_call.1} parent=31 // pred_check_branch
          %282 = sbr.rel (%p280) target = $region36
        $region35: #{tpu_custom_call.1} parent=31 // pred_region
          %s283 = sand.u32 %s47, 1
          %s284 = scalar_lea.sflag [#allocation3], %s283
          %s285 = sand.u32 %s47, 1
          %s286 = smul.addr %s285, 4
          %s287 = scalar_lea.vmem [#allocation2], %s286
          %289 = vsyncadd %s284, 0
          %s290 = sadd.s32 %s31, %s30
          %s291 = smul.addr %s290, 4
          %s292 = scalar_lea.hbm %s0, %s291
          %s294 = sshll.u32 %s292, 4
          %s295 = int_to_ptr.hbm [resolvable:$true] %s294
          %s296 = sshll.u32 %s287, 4
          %s297 = int_to_ptr.vmem [resolvable:$true] %s296
          %299 = dma.hbm_to_vmem [thread:$0]  %s295, 64, %s297, %s284
        $region36: #{tpu_custom_call.1} parent=31 // pred_fallthru
          _
        // Predicated region
        $region37: #{tpu_custom_call.1} parent=31 // pred_check
          %p300 = pneg %p83
        $region38: #{tpu_custom_call.1} parent=31 // pred_check_branch
          %302 = sbr.rel (%p300) target = $region40
        $region39: #{tpu_custom_call.1} parent=31 // pred_region
          %s303 = sand.u32 %s23, 1
          %s304 = scalar_lea.sflag [#allocation6], %s303
          %s305 = sand.u32 %s73, 1
          %s306 = smul.addr %s305, 4
          %s307 = scalar_lea.vmem [#allocation5], %s306
          %309 = vsyncadd %s304, 0
          %s310 = smul.addr %s30, 4
          %s311 = scalar_lea.hbm %s1, %s310
          %s313 = sshll.u32 %s311, 4
          %s314 = int_to_ptr.hbm [resolvable:$true] %s313
          %s315 = sshll.u32 %s307, 4
          %s316 = int_to_ptr.vmem [resolvable:$true] %s315
          %318 = dma.hbm_to_vmem [thread:$0]  %s314, 64, %s316, %s304
        $region40: #{tpu_custom_call.1} parent=31 // pred_fallthru
          _
        // Predicated region
        $region41: #{tpu_custom_call.1} parent=31 // pred_check
          %p319 = pneg %p109
        $region42: #{tpu_custom_call.1} parent=31 // pred_check_branch
          %321 = sbr.rel (%p319) target = $region44
        $region43: #{tpu_custom_call.1} parent=31 // pred_region
          %s322 = sand.u32 %s23, 1
          %s323 = scalar_lea.sflag [#allocation6], %s322
          %s324 = sand.u32 %s99, 1
          %s325 = smul.addr %s324, 4
          %s326 = scalar_lea.vmem [#allocation7], %s325
          %328 = vsyncadd %s323, 0
          %s329 = smul.addr %s30, 4
          %s330 = scalar_lea.hbm %s2, %s329
          %s332 = sshll.u32 %s330, 4
          %s333 = int_to_ptr.hbm [resolvable:$true] %s332
          %s334 = sshll.u32 %s326, 4
          %s335 = int_to_ptr.vmem [resolvable:$true] %s334
          %337 = dma.hbm_to_vmem [thread:$0]  %s333, 64, %s335, %s323
        $region44: #{tpu_custom_call.1} parent=31 // pred_fallthru
          _
      $region32: #{tpu_custom_call.1} parent=5 // pred_fallthru
        _
      %p338 = scmp.le.s32.totalorder 1, %s23
      %p339 = scmp.lt.s32.totalorder %s23, 3
      %p340 = pnand %p338, %p339
      %p341 = pneg %p340
      // Predicated region
      $region45: #{tpu_custom_call.1} parent=5 // pred_check
        _
      $region46: #{tpu_custom_call.1} parent=5 // pred_check_branch
        %343 = sbr.rel (%p340) target = $region48
      $region47: #{tpu_custom_call.1} parent=5 // pred_region
        %s344 = ssub.s32 %s23, 1
        %s345 = sand.u32 %s50, 1
        %s346 = scalar_lea.sflag [#allocation3], %s345
        %s347 = sand.u32 %s50, 1
        %s348 = smul.addr %s347, 4
        %s349 = scalar_lea.vmem [#allocation2], %s348
        // Predicated region
        $region49: #{tpu_custom_call.1} parent=47 // pred_check
          %p350 = pneg %p63
        $region50: #{tpu_custom_call.1} parent=47 // pred_check_branch
          %352 = sbr.rel (%p350) target = $region52
        $region51: #{tpu_custom_call.1} parent=47 // pred_region
          %354 = dma.done %s346, 64
        $region52: #{tpu_custom_call.1} parent=47 // pred_fallthru
          _
        %s355 = sand.u32 %s28, 1
        %s356 = scalar_lea.sflag [#allocation6], %s355
        %s357 = sand.u32 %s76, 1
        %s358 = smul.addr %s357, 4
        %s359 = scalar_lea.vmem [#allocation5], %s358
        // Predicated region
        $region53: #{tpu_custom_call.1} parent=47 // pred_check
          %p360 = pneg %p89
        $region54: #{tpu_custom_call.1} parent=47 // pred_check_branch
          %362 = sbr.rel (%p360) target = $region56
        $region55: #{tpu_custom_call.1} parent=47 // pred_region
          %364 = dma.done %s356, 64
        $region56: #{tpu_custom_call.1} parent=47 // pred_fallthru
          _
        %s365 = sand.u32 %s28, 1
        %s366 = scalar_lea.sflag [#allocation6], %s365
        %s367 = sand.u32 %s102, 1
        %s368 = smul.addr %s367, 4
        %s369 = scalar_lea.vmem [#allocation7], %s368
        // Predicated region
        $region57: #{tpu_custom_call.1} parent=47 // pred_check
          %p370 = pneg %p115
        $region58: #{tpu_custom_call.1} parent=47 // pred_check_branch
          %372 = sbr.rel (%p370) target = $region60
        $region59: #{tpu_custom_call.1} parent=47 // pred_region
          %374 = dma.done %s366, 64
        $region60: #{tpu_custom_call.1} parent=47 // pred_fallthru
          _
        // Predicated region
        $region61: #{tpu_custom_call.1} parent=47 // pred_check
          %p375 = pneg %p136
        $region62: #{tpu_custom_call.1} parent=47 // pred_check_branch
          %377 = sbr.rel (%p375) target = $region64
        $region63: #{tpu_custom_call.1} parent=47 // pred_region
          %379 = dma.done [#allocation9], 768
        $region64: #{tpu_custom_call.1} parent=47 // pred_fallthru
          _
        // Predicated region
        $region65: #{tpu_custom_call.1} parent=47 // pred_check
          %p380 = pneg %p178
        $region66: #{tpu_custom_call.1} parent=47 // pred_check_branch
          %382 = sbr.rel (%p380) target = $region68
        $region67: #{tpu_custom_call.1} parent=47 // pred_region
          %384 = dma.done [#allocation9], 256
        $region68: #{tpu_custom_call.1} parent=47 // pred_fallthru
          _
        %s385 = sand.u32 %s50, 1
        %s386 = scalar_lea.sflag [#allocation3], %s385
        %s387 = sand.u32 %s50, 1
        %s388 = smul.addr %s387, 4
        %s389 = scalar_lea.vmem [#allocation2], %s388
        %p390 = pneg %p63
        %p391 = pneg %p60
        %s392 = sand.u32 %s28, 1
        %s393 = scalar_lea.sflag [#allocation6], %s392
        %s394 = sand.u32 %s76, 1
        %s395 = smul.addr %s394, 4
        %s396 = scalar_lea.vmem [#allocation5], %s395
        %p397 = pneg %p89
        %p398 = pneg %p86
        %s399 = sand.u32 %s28, 1
        %s400 = scalar_lea.sflag [#allocation6], %s399
        %s401 = sand.u32 %s102, 1
        %s402 = smul.addr %s401, 4
        %s403 = scalar_lea.vmem [#allocation7], %s402
        %p404 = pneg %p115
        %p405 = pneg %p112
        %p406 = pneg %p136
        %p407 = pneg %p133
        %p408 = pneg %p157
        %p409 = pneg %p154
        %p410 = pneg %p178
        %p411 = pneg %p175
        %p412 = pneg %p199
        %p413 = pneg %p196
        %p414 = pneg %p227
        %p415 = pneg %p224
        %s416 = sand.u32 %s214, 1
        %s417 = scalar_lea.sflag [#allocation4], %s416
        %s418 = sand.u32 %s214, 1
        %s419 = smul.addr %s418, 8
        %s420 = scalar_lea.vmem [#allocation11], %s419
        %v422 = vld [vmem:[%s349] sm:$0xf]
        %v423 = vld [vmem:[%s359] sm:$0xf]
        %v424 = vld [vmem:[%s369] sm:$0xf]
        %v425 = vld [vmem:[#allocation8] sm:$0xf]
        %v426 = vld [vmem:[#allocation8 + $0x4] sm:$0xf]
        %v427 = vld [vmem:[#allocation8 + $0x8] sm:$0xf]
        %v428 = vld [vmem:[#allocation8 + $0xc] sm:$0xf]
        %v429 = vld [vmem:[%s4] sm:$0x1]
        %v431 = vperm.slane %v429, 0
        %v437 = vunpack.c.l.b16 %v425
        %v438 = vunpack.c.l.b16 %v426
        %v439 = vunpack.c.l.b16 %v427
        %v440 = vunpack.c.l.b16 %v428
        %v441 = vpack.c.b16 %v438, %v437
        %v442 = vpack.c.b16 %v440, %v439
        %vm445 = vcmask 261120
        %v447 = vsel %vm445, %v422, 0
        %449 = vmatpush.bf16.msra.mxu0 0
        %450 = vmatpush.bf16.msra.mxu0 0
        %451 = vmatpush.bf16.msra.mxu0 0
        %452 = vmatpush.bf16.msra.mxu0 0
        %453 = vmatpush.bf16.msra.mxu0 0
        %454 = vmatpush.bf16.msra.mxu0 0
        %455 = vmatpush.bf16.msra.mxu0 %v442
        %456 = vmatpush.bf16.msra.mxu0 %v441
        %457 = vmatmul.bf16.gmra.mxu0 %v447
        %v458 = vpop.f32.mrf.mxu0
        %v459 = vadd.f32 %v431, %v458
        %v460 = vpop.f32.mrf.mxu0
        %461 = vdwg.mxu0
        %s462 = scalar_lea.vmem [#allocation8], 16
        %v463 = vld [vmem:[%s462] sm:$0xf]
        %v464 = vld [vmem:[%s462 + $0x4] sm:$0xf]
        %v465 = vld [vmem:[%s462 + $0x8] sm:$0xf]
        %v466 = vld [vmem:[%s462 + $0xc] sm:$0xf]
        %s467 = scalar_lea.vmem %s4, 1
        %v468 = vld [vmem:[%s467] sm:$0x1]
        %v470 = vperm.slane %v468, 0
        %v476 = vunpack.c.l.b16 %v463
        %v477 = vunpack.c.l.b16 %v464
        %v478 = vunpack.c.l.b16 %v465
        %v479 = vunpack.c.l.b16 %v466
        %v480 = vpack.c.b16 %v477, %v476
        %v481 = vpack.c.b16 %v479, %v478
        %v485 = vsel %vm445, %v423, 0
        %487 = vmatpush.bf16.msra.mxu0 0
        %488 = vmatpush.bf16.msra.mxu0 0
        %489 = vmatpush.bf16.msra.mxu0 0
        %490 = vmatpush.bf16.msra.mxu0 0
        %491 = vmatpush.bf16.msra.mxu0 0
        %492 = vmatpush.bf16.msra.mxu0 0
        %493 = vmatpush.bf16.msra.mxu0 %v481
        %494 = vmatpush.bf16.msra.mxu0 %v480
        %495 = vmatmul.bf16.gmra.mxu0 %v485
        %v496 = vpop.f32.mrf.mxu0
        %v497 = vadd.f32 %v470, %v496
        %v498 = vpop.f32.mrf.mxu0
        %499 = vdwg.mxu0
        %s500 = scalar_lea.vmem [#allocation8], 32
        %v501 = vld [vmem:[%s500] sm:$0xf]
        %v502 = vld [vmem:[%s500 + $0x4] sm:$0xf]
        %v503 = vld [vmem:[%s500 + $0x8] sm:$0xf]
        %v504 = vld [vmem:[%s500 + $0xc] sm:$0xf]
        %s505 = scalar_lea.vmem %s4, 2
        %v506 = vld [vmem:[%s505] sm:$0x1]
        %v508 = vperm.slane %v506, 0
        %v514 = vunpack.c.l.b16 %v501
        %v515 = vunpack.c.l.b16 %v502
        %v516 = vunpack.c.l.b16 %v503
        %v517 = vunpack.c.l.b16 %v504
        %v518 = vpack.c.b16 %v515, %v514
        %v519 = vpack.c.b16 %v517, %v516
        %v523 = vsel %vm445, %v424, 0
        %525 = vmatpush.bf16.msra.mxu0 0
        %526 = vmatpush.bf16.msra.mxu0 0
        %527 = vmatpush.bf16.msra.mxu0 0
        %528 = vmatpush.bf16.msra.mxu0 0
        %529 = vmatpush.bf16.msra.mxu0 0
        %530 = vmatpush.bf16.msra.mxu0 0
        %531 = vmatpush.bf16.msra.mxu0 %v519
        %532 = vmatpush.bf16.msra.mxu0 %v518
        %533 = vmatmul.bf16.gmra.mxu0 %v523
        %v534 = vpop.f32.mrf.mxu0
        %v535 = vadd.f32 %v508, %v534
        %v536 = vpop.f32.mrf.mxu0
        %537 = vdwg.mxu0
        %s538 = smul.u32 %s33, 8
        %v539 = vlaneseq
        %v540 = vshrl.u32 %v539, 7
        %v541 = vstv %s538
        %v542 = vadd.s32 %v541, %v540
        %v543 = vlaneseq
        %v544 = vand.u32 %v543, 127
        %vm545 = vcmp.gt.s32.totalorder %v544, %v542
        %v546 = vsel %vm545, -1e+09, 0.0
        %v547 = vpack.c.bf16 %v459, %v459
        %v548 = vpack.c.bf16 %v497, %v497
        %v549 = vpack.c.bf16 %v535, %v535
        %vm550 = vcmask 64512
        %v552 = vsel %vm550, %v547, 0
        %v555 = vsel %vm550, %v548, 0
        %557 = vmatpush.bf16.xpose.msra.mxu0 0
        %558 = vmatpush.bf16.xpose.msra.mxu0 0
        %559 = vmatpush.bf16.xpose.msra.mxu0 0
        %560 = vmatpush.bf16.xpose.msra.mxu0 0
        %561 = vmatpush.bf16.xpose.msra.mxu0 0
        %562 = vmatpush.bf16.xpose.msra.mxu0 0
        %563 = vmatpush.bf16.xpose.msra.mxu0 0
        %564 = vmatpush.bf16.xpose.msra.mxu0 %v555
        %565 = vmatmul.bf16.gmra.mxu0 %v552
        %v566 = vpop.f32.mrf.mxu0
        %v567 = vadd.f32 %v546, %v566
        %v568 = vpop.f32.mrf.mxu0
        %569 = vdwg.mxu0
        %v570 = vsel %vm550, %v567, -inf
        %571 = vmax.xlane.f32.xlu0 %v570
        %v572 = vpop.xlane.xlu0 %571
        %v573 = vsub.f32 %v567, %v572
        %v574 = vmul.f32 %v573, 1.442695
        %v575 = vpow.pop %v574
        %v576 = vsel %vm550, %v575, 0.0
        %577 = vadd.xlane.f32.xlu0 %v576
        %v578 = vpop.xlane.xlu0 %577
        %v579 = vrcp.pop %v578
        %v580 = vmul.f32 %v575, %v579
        %v581 = vpack.c.bf16 %v580, %v580
        %v583 = vsel %vm550, %v581, 0
        %vm585 = vcmask 1043456
        %v587 = vsel %vm585, %v549, 0
        %589 = vmatpush.bf16.msra.mxu0 0
        %590 = vmatpush.bf16.msra.mxu0 0
        %591 = vmatpush.bf16.msra.mxu0 0
        %592 = vmatpush.bf16.msra.mxu0 0
        %593 = vmatpush.bf16.msra.mxu0 0
        %594 = vmatpush.bf16.msra.mxu0 0
        %595 = vmatpush.bf16.msra.mxu0 0
        %596 = vmatpush.bf16.msra.mxu0 %v587
        %597 = vmatmul.bf16.gmra.mxu0 %v583
        %v598 = vpop.f32.mrf.mxu0
        %v599 = vadd.f32 0.0, %v598
        %v600 = vpop.f32.mrf.mxu0
        %601 = vdwg.mxu0
        %v602 = vpack.c.bf16 %v599, %v599
        %v603 = vld [vmem:[#allocation10] sm:$0xf]
        %605 = vrot.lane.b32.xlu0 %v547, 120
        %v606 = vpop.permute.xlu0 %605
        %608 = vrot.lane.b32.xlu0 %v548, 120
        %v609 = vpop.permute.xlu0 %608
        %v611 = vsel %vm550, %v606, 0
        %v614 = vsel %vm550, %v609, 0
        %616 = vmatpush.bf16.xpose.msra.mxu0 0
        %617 = vmatpush.bf16.xpose.msra.mxu0 0
        %618 = vmatpush.bf16.xpose.msra.mxu0 0
        %619 = vmatpush.bf16.xpose.msra.mxu0 0
        %620 = vmatpush.bf16.xpose.msra.mxu0 0
        %621 = vmatpush.bf16.xpose.msra.mxu0 0
        %622 = vmatpush.bf16.xpose.msra.mxu0 0
        %623 = vmatpush.bf16.xpose.msra.mxu0 %v614
        %624 = vmatmul.bf16.gmra.mxu0 %v611
        %v625 = vpop.f32.mrf.mxu0
        %v626 = vadd.f32 %v546, %v625
        %v627 = vpop.f32.mrf.mxu0
        %628 = vdwg.mxu0
        %v629 = vsel %vm550, %v626, -inf
        %630 = vmax.xlane.f32.xlu0 %v629
        %v631 = vpop.xlane.xlu0 %630
        %v632 = vsub.f32 %v626, %v631
        %v633 = vmul.f32 %v632, 1.442695
        %v634 = vpow.pop %v633
        %v635 = vsel %vm550, %v634, 0.0
        %636 = vadd.xlane.f32.xlu0 %v635
        %v637 = vpop.xlane.xlu0 %636
        %v638 = vrcp.pop %v637
        %v639 = vmul.f32 %v634, %v638
        %v640 = vpack.c.bf16 %v639, %v639
        %642 = vrot.lane.b32.xlu0 %v549, 120
        %v643 = vpop.permute.xlu0 %642
        %v645 = vsel %vm550, %v640, 0
        %v648 = vsel %vm585, %v643, 0
        %650 = vmatpush.bf16.msra.mxu0 0
        %651 = vmatpush.bf16.msra.mxu0 0
        %652 = vmatpush.bf16.msra.mxu0 0
        %653 = vmatpush.bf16.msra.mxu0 0
        %654 = vmatpush.bf16.msra.mxu0 0
        %655 = vmatpush.bf16.msra.mxu0 0
        %656 = vmatpush.bf16.msra.mxu0 0
        %657 = vmatpush.bf16.msra.mxu0 %v648
        %658 = vmatmul.bf16.gmra.mxu0 %v645
        %v659 = vpop.f32.mrf.mxu0
        %v660 = vadd.f32 0.0, %v659
        %v661 = vpop.f32.mrf.mxu0
        %662 = vdwg.mxu0
        %v663 = vpack.c.bf16 %v660, %v660
        %v664 = vld [vmem:[#allocation10 + $0x4] sm:$0xf]
        %v666 = vsel %vm550, %v663, 0
        %v669 = vsel %vm585, %v664, 0
        %671 = vmatpush.bf16.msra.mxu0 0
        %672 = vmatpush.bf16.msra.mxu0 0
        %673 = vmatpush.bf16.msra.mxu0 0
        %674 = vmatpush.bf16.msra.mxu0 0
        %675 = vmatpush.bf16.msra.mxu0 0
        %676 = vmatpush.bf16.msra.mxu0 0
        %677 = vmatpush.bf16.msra.mxu0 0
        %678 = vmatpush.bf16.msra.mxu0 %v669
        %679 = vmatmul.bf16.gmra.mxu0 %v666
        %v680 = vpop.f32.mrf.mxu0
        %v681 = vadd.f32 0.0, %v680
        %v682 = vpop.f32.mrf.mxu0
        %683 = vdwg.mxu0
        %v685 = vsel %vm550, %v602, 0
        %v688 = vsel %vm585, %v603, 0
        %690 = vmatpush.bf16.msra.mxu0 0
        %691 = vmatpush.bf16.msra.mxu0 0
        %692 = vmatpush.bf16.msra.mxu0 0
        %693 = vmatpush.bf16.msra.mxu0 0
        %694 = vmatpush.bf16.msra.mxu0 0
        %695 = vmatpush.bf16.msra.mxu0 0
        %696 = vmatpush.bf16.msra.mxu0 0
        %697 = vmatpush.bf16.msra.mxu0 %v688
        %698 = vmatmul.bf16.gmra.mxu0 %v685
        %v699 = vpop.f32.mrf.mxu0
        %v700 = vadd.f32 %v681, %v699
        %v701 = vpop.f32.mrf.mxu0
        %702 = vdwg.mxu0
        %703 = vrot.lane.b32.xlu0 %v547, 112
        %v704 = vpop.permute.xlu0 %703
        %705 = vrot.lane.b32.xlu0 %v548, 112
        %v706 = vpop.permute.xlu0 %705
        %v708 = vsel %vm550, %v704, 0
        %v711 = vsel %vm550, %v706, 0
        %713 = vmatpush.bf16.xpose.msra.mxu0 0
        %714 = vmatpush.bf16.xpose.msra.mxu0 0
        %715 = vmatpush.bf16.xpose.msra.mxu0 0
        %716 = vmatpush.bf16.xpose.msra.mxu0 0
        %717 = vmatpush.bf16.xpose.msra.mxu0 0
        %718 = vmatpush.bf16.xpose.msra.mxu0 0
        %719 = vmatpush.bf16.xpose.msra.mxu0 0
        %720 = vmatpush.bf16.xpose.msra.mxu0 %v711
        %721 = vmatmul.bf16.gmra.mxu0 %v708
        %v722 = vpop.f32.mrf.mxu0
        %v723 = vadd.f32 %v546, %v722
        %v724 = vpop.f32.mrf.mxu0
        %725 = vdwg.mxu0
        %v726 = vsel %vm550, %v723, -inf
        %727 = vmax.xlane.f32.xlu0 %v726
        %v728 = vpop.xlane.xlu0 %727
        %v729 = vsub.f32 %v723, %v728
        %v730 = vmul.f32 %v729, 1.442695
        %v731 = vpow.pop %v730
        %v732 = vsel %vm550, %v731, 0.0
        %733 = vadd.xlane.f32.xlu0 %v732
        %v734 = vpop.xlane.xlu0 %733
        %v735 = vrcp.pop %v734
        %v736 = vmul.f32 %v731, %v735
        %v737 = vpack.c.bf16 %v736, %v736
        %738 = vrot.lane.b32.xlu0 %v549, 112
        %v739 = vpop.permute.xlu0 %738
        %v741 = vsel %vm550, %v737, 0
        %v744 = vsel %vm585, %v739, 0
        %746 = vmatpush.bf16.msra.mxu0 0
        %747 = vmatpush.bf16.msra.mxu0 0
        %748 = vmatpush.bf16.msra.mxu0 0
        %749 = vmatpush.bf16.msra.mxu0 0
        %750 = vmatpush.bf16.msra.mxu0 0
        %751 = vmatpush.bf16.msra.mxu0 0
        %752 = vmatpush.bf16.msra.mxu0 0
        %753 = vmatpush.bf16.msra.mxu0 %v744
        %754 = vmatmul.bf16.gmra.mxu0 %v741
        %v755 = vpop.f32.mrf.mxu0
        %v756 = vadd.f32 0.0, %v755
        %v757 = vpop.f32.mrf.mxu0
        %758 = vdwg.mxu0
        %v759 = vpack.c.bf16 %v756, %v756
        %v760 = vld [vmem:[#allocation10 + $0x8] sm:$0xf]
        %v762 = vsel %vm550, %v759, 0
        %v765 = vsel %vm585, %v760, 0
        %767 = vmatpush.bf16.msra.mxu0 0
        %768 = vmatpush.bf16.msra.mxu0 0
        %769 = vmatpush.bf16.msra.mxu0 0
        %770 = vmatpush.bf16.msra.mxu0 0
        %771 = vmatpush.bf16.msra.mxu0 0
        %772 = vmatpush.bf16.msra.mxu0 0
        %773 = vmatpush.bf16.msra.mxu0 0
        %774 = vmatpush.bf16.msra.mxu0 %v765
        %775 = vmatmul.bf16.gmra.mxu0 %v762
        %v776 = vpop.f32.mrf.mxu0
        %v777 = vadd.f32 0.0, %v776
        %v778 = vpop.f32.mrf.mxu0
        %779 = vdwg.mxu0
        %v780 = vadd.f32 %v700, %v777
        %781 = vrot.lane.b32.xlu0 %v547, 104
        %v782 = vpop.permute.xlu0 %781
        %783 = vrot.lane.b32.xlu0 %v548, 104
        %v784 = vpop.permute.xlu0 %783
        %v786 = vsel %vm550, %v782, 0
        %v789 = vsel %vm550, %v784, 0
        %791 = vmatpush.bf16.xpose.msra.mxu0 0
        %792 = vmatpush.bf16.xpose.msra.mxu0 0
        %793 = vmatpush.bf16.xpose.msra.mxu0 0
        %794 = vmatpush.bf16.xpose.msra.mxu0 0
        %795 = vmatpush.bf16.xpose.msra.mxu0 0
        %796 = vmatpush.bf16.xpose.msra.mxu0 0
        %797 = vmatpush.bf16.xpose.msra.mxu0 0
        %798 = vmatpush.bf16.xpose.msra.mxu0 %v789
        %799 = vmatmul.bf16.gmra.mxu0 %v786
        %v800 = vpop.f32.mrf.mxu0
        %v801 = vadd.f32 %v546, %v800
        %v802 = vpop.f32.mrf.mxu0
        %803 = vdwg.mxu0
        %v804 = vsel %vm550, %v801, -inf
        %805 = vmax.xlane.f32.xlu0 %v804
        %v806 = vpop.xlane.xlu0 %805
        %v807 = vsub.f32 %v801, %v806
        %v808 = vmul.f32 %v807, 1.442695
        %v809 = vpow.pop %v808
        %v810 = vsel %vm550, %v809, 0.0
        %811 = vadd.xlane.f32.xlu0 %v810
        %v812 = vpop.xlane.xlu0 %811
        %v813 = vrcp.pop %v812
        %v814 = vmul.f32 %v809, %v813
        %v815 = vpack.c.bf16 %v814, %v814
        %816 = vrot.lane.b32.xlu0 %v549, 104
        %v817 = vpop.permute.xlu0 %816
        %v819 = vsel %vm550, %v815, 0
        %v822 = vsel %vm585, %v817, 0
        %824 = vmatpush.bf16.msra.mxu0 0
        %825 = vmatpush.bf16.msra.mxu0 0
        %826 = vmatpush.bf16.msra.mxu0 0
        %827 = vmatpush.bf16.msra.mxu0 0
        %828 = vmatpush.bf16.msra.mxu0 0
        %829 = vmatpush.bf16.msra.mxu0 0
        %830 = vmatpush.bf16.msra.mxu0 0
        %831 = vmatpush.bf16.msra.mxu0 %v822
        %832 = vmatmul.bf16.gmra.mxu0 %v819
        %v833 = vpop.f32.mrf.mxu0
        %v834 = vadd.f32 0.0, %v833
        %v835 = vpop.f32.mrf.mxu0
        %836 = vdwg.mxu0
        %v837 = vpack.c.bf16 %v834, %v834
        %v838 = vld [vmem:[#allocation10 + $0xc] sm:$0xf]
        %v840 = vsel %vm550, %v837, 0
        %v843 = vsel %vm585, %v838, 0
        %845 = vmatpush.bf16.msra.mxu0 0
        %846 = vmatpush.bf16.msra.mxu0 0
        %847 = vmatpush.bf16.msra.mxu0 0
        %848 = vmatpush.bf16.msra.mxu0 0
        %849 = vmatpush.bf16.msra.mxu0 0
        %850 = vmatpush.bf16.msra.mxu0 0
        %851 = vmatpush.bf16.msra.mxu0 0
        %852 = vmatpush.bf16.msra.mxu0 %v843
        %853 = vmatmul.bf16.gmra.mxu0 %v840
        %v854 = vpop.f32.mrf.mxu0
        %v855 = vadd.f32 0.0, %v854
        %v856 = vpop.f32.mrf.mxu0
        %857 = vdwg.mxu0
        %v858 = vadd.f32 %v780, %v855
        %v859 = vld [vmem:[%s6] sm:$0x1]
        %v861 = vperm.slane %v859, 0
        %v863 = vadd.f32 %v858, %v861
        %864 = vst.msk [vmem:[%s420] sm:$0xff] %vm445, %v863
        %s865 = sand.u32 %s214, 1
        %s866 = scalar_lea.sflag [#allocation4], %s865
        %s867 = sand.u32 %s214, 1
        %s868 = smul.addr %s867, 8
        %s869 = scalar_lea.vmem [#allocation11], %s868
        // Predicated region
        $region69: #{tpu_custom_call.1} parent=47 // pred_check
          %p870 = pneg %p224
        $region70: #{tpu_custom_call.1} parent=47 // pred_check_branch
          %872 = sbr.rel (%p870) target = $region72
        $region71: #{tpu_custom_call.1} parent=47 // pred_region
          %874 = vsyncadd %s866, 0
          %s875 = sadd.s32 %s33, %s32
          %s876 = smul.addr %s875, 8
          %s877 = scalar_lea.hbm %s7, %s876
          %s879 = sshll.u32 %s869, 4
          %s880 = int_to_ptr.vmem [resolvable:$true] %s879
          %s881 = sshll.u32 %s877, 4
          %s882 = int_to_ptr.hbm [resolvable:$true] %s881
          %884 = dma.vmem_to_hbm [thread:$0]  %s880, 128, %s882, %s866
        $region72: #{tpu_custom_call.1} parent=47 // pred_fallthru
          _
      $region48: #{tpu_custom_call.1} parent=5 // pred_fallthru
        _
      %p885 = scmp.le.s32.totalorder 2, %s23
      // Predicated region
      $region73: #{tpu_custom_call.1} parent=5 // pred_check
        %p886 = pneg %p885
      $region74: #{tpu_custom_call.1} parent=5 // pred_check_branch
        %888 = sbr.rel (%p886) target = $region76
      $region75: #{tpu_custom_call.1} parent=5 // pred_region
        %s889 = ssub.s32 %s23, 2
        // Predicated region
        $region77: #{tpu_custom_call.1} parent=75 // pred_check
          %p890 = pneg %p230
        $region78: #{tpu_custom_call.1} parent=75 // pred_check_branch
          %892 = sbr.rel (%p890) target = $region80
        $region79: #{tpu_custom_call.1} parent=75 // pred_region
          %s893 = sand.u32 %s215, 1
          %s894 = scalar_lea.sflag [#allocation4], %s893
          %s895 = sand.u32 %s215, 1
          %s896 = smul.addr %s895, 8
          %s897 = scalar_lea.vmem [#allocation11], %s896
          %899 = dma.done %s894, 128
        $region80: #{tpu_custom_call.1} parent=75 // pred_fallthru
          _
      $region76: #{tpu_custom_call.1} parent=5 // pred_fallthru
        _
    $region6: #{tpu_custom_call.1} parent=1 // loop_footer
      %s27 = sadd.s32 1, %s23
    $region7: #{tpu_custom_call.1} parent=1 // loop_footer_branch
      %22 = sbr.rel target = $region3
    $region8: #{tpu_custom_call.1} parent=1 // loop_exit
      _
    %900 = vsyncpa [#allocation3], 1
    %s901 = scalar_lea.sflag [#allocation3], 1
    %902 = vsyncpa %s901, 1
    %903 = vsyncpa [#allocation6], 1
    %s904 = scalar_lea.sflag [#allocation6], 1
    %905 = vsyncpa %s904, 1
    %906 = vsyncpa [#allocation9], 1
    %907 = vsyncpa [#allocation4], 1
    %s908 = scalar_lea.sflag [#allocation4], 1
    %909 = vsyncpa %s908, 1

</llo_original>
